<compile_context>
chip_gen: v6e
topology: v6e:2x2x1
jax: 0.10.0
libtpu: 0.0.40
codegen_flags: <defaults>
</compile_context>

<pallas_src>
import functools

import jax
import jax.numpy as jnp
import numpy as np
from jax.experimental import pallas as pl
from jax.experimental.pallas import tpu as pltpu


def _sym_pairs(n):
    return [(i, j) for i in range(n) for j in range(i, n)]


def _round_up(x, m):
    return ((x + m - 1) // m) * m


# --------------------------------------------------------------------------- kernel ---
def _nonequi_attn_kernel(x_ref, a1_ref, wb_ref, o_ref, *, d):
    """One tile of TG independent (batch, multivector-component) items.

    x_ref  : (Cin, TG, S)   lane-dense input slabs (S on lanes, TG on sublanes)
    a1_ref : (NF, D*D)      folded Wq/Wk/bq/bk score matrix (NF = Cin*(Cin+1)/2 + Cin + 1)
    wb_ref : (D+1, Cout*Cin + Cout)  folded Wo/Wv/bv/bo matrix (last row carries bo)
    o_ref  : (Cout, TG, S)
    """
    c_in = x_ref.shape[0]
    c_out = o_ref.shape[0]
    n_w = c_out * c_in

    x = x_ref[...].astype(jnp.float32)                                   # (Cin, TG, S)

    # Per-item second-moment features over the sequence (lane) axis:
    #   Gram[i,j] = sum_s x_i x_j (i<=j),  r[i] = sum_s x_i,  const 1.
    cols = [jnp.sum(x[i] * x[j], axis=-1, keepdims=True) for i, j in _sym_pairs(c_in)]
    cols += [jnp.sum(x[i], axis=-1, keepdims=True) for i in range(c_in)]
    ones = jnp.ones_like(cols[0])                                        # (TG, 1)
    cols.append(ones)
    feat = jnp.concatenate(cols, axis=-1)                                # (TG, NF)

    # All D*D channel-channel attention scores with ONE streamed MXU matmul.
    scores = jnp.dot(feat, a1_ref[...], preferred_element_type=jnp.float32)  # (TG, D*D)

    # Softmax over C for every row c (exact per-group max, exact reciprocal), reduced to
    # colsum[C] = sum_c softmax(scores[c, :])[C] -- the only part of A the output needs.
    colsum = jnp.zeros(ones.shape[:1] + (d,), jnp.float32)               # (TG, D)
    for c in range(d):
        s_c = scores[:, c * d:(c + 1) * d]
        e_c = jnp.exp(s_c - jnp.max(s_c, axis=-1, keepdims=True))
        colsum = colsum + e_c / jnp.sum(e_c, axis=-1, keepdims=True)

    # Fold colsum with Wo/Wv/bv/bo into per-item effective (Cout, Cin) weights + bias.
    wb = jnp.dot(jnp.concatenate([colsum, ones], axis=-1), wb_ref[...],
                 preferred_element_type=jnp.float32)                     # (TG, Cout*Cin+Cout)

    # Apply the per-item weights with VPU broadcast-FMAs over the lane-dense slabs.
    for o in range(c_out):
        y = wb[:, n_w + o:n_w + o + 1]                                   # (TG, 1) bias
        for i in range(c_in):
            y = y + wb[:, o * c_in + i:o * c_in + i + 1] * x[i]          # (TG,1)*(TG,S)
        o_ref[o] = y.astype(o_ref.dtype)


# ------------------------------------------------------------------ host-side folding ---
def _fold_params(params, s_dim):
    """Fold the four NonEquiMVLinear weight/bias sets into the two tiny kernel matrices."""
    wq = jnp.asarray(params['wq'], jnp.float32)
    wk = jnp.asarray(params['wk'], jnp.float32)
    wv = jnp.asarray(params['wv'], jnp.float32)
    wo = jnp.asarray(params['wo'], jnp.float32)
    bq = jnp.asarray(params['bq'], jnp.float32)
    bk = jnp.asarray(params['bk'], jnp.float32)
    bv = jnp.asarray(params['bv'], jnp.float32)
    bo = jnp.asarray(params['bo'], jnp.float32)
    d, c_in = wq.shape
    c_out = wo.shape[0]

    # A1: features [Gram(i<=j), rowsum(i), 1] -> scores[c*D + C]
    rows = []
    for i, j in _sym_pairs(c_in):
        r = jnp.outer(wq[:, i], wk[:, j])
        if i != j:
            r = r + jnp.outer(wq[:, j], wk[:, i])
        rows.append(r.reshape(-1))
    for i in range(c_in):
        rows.append((jnp.outer(wq[:, i], bk) + jnp.outer(bq, wk[:, i])).reshape(-1))
    rows.append((float(s_dim) * jnp.outer(bq, bk)).reshape(-1))
    a1 = jnp.stack(rows, axis=0).astype(jnp.float32)                     # (NF, D*D)

    # WB: [colsum(C), 1] -> [Weff[o*Cin+i], beff[o]]
    w_eff = jnp.einsum('oC,Ci->Coi', wo, wv).reshape(d, c_out * c_in)    # row C
    b_eff = (wo * bv[None, :]).T                                         # (D, Cout)
    top = jnp.concatenate([w_eff, b_eff], axis=-1)
    bot = jnp.concatenate([jnp.zeros((1, c_out * c_in), jnp.float32), bo[None, :]], axis=-1)
    wb = jnp.concatenate([top, bot], axis=0).astype(jnp.float32)         # (D+1, Cout*Cin+Cout)
    return a1, wb


def _vmem_capacity_bytes():
    try:
        return int(pltpu.get_tpu_info().vmem_capacity_bytes)
    except Exception:  # pragma: no cover - conservative (v7x-safe) fallback
        return 64 * 1024 * 1024


def _pick_block_g(g_total, c_in, c_out, s_dim, itemsize, budget_bytes):
    """Size-driven TG (multiple of 8) that fits the VMEM budget and keeps >=2 grid steps."""
    def footprint(tg):
        io = 2 * tg * s_dim * (c_in + c_out) * itemsize          # double-buffered x / out
        slabs = tg * s_dim * 4 * (c_in + c_out + 2)              # f32 x, y and temporaries
        small = tg * 2048                                        # feat/scores/colsum/wb
        return io + slabs + small

    tg = max(8, min(512, _round_up(pl.cdiv(g_total, 2), 8)))     # >=2 steps when possible
    while tg > 8 and footprint(tg) > budget_bytes:
        tg -= 8
    return min(tg, max(g_total, 1))


# --------------------------------------------------------------------------- wrappers ---
def nonequi_channels_attention(x_cgs, params, *, block_g=None):
    """Native-layout forward.  x_cgs: (Cin, G, S) with G = batch * M.  Returns (Cout, G, S)."""
    c_in, g_total, s_dim = x_cgs.shape
    d = params['wq'].shape[0]
    c_out = params['wo'].shape[0]

    a1, wb = _fold_params(params, s_dim)

    vmem_cap = _vmem_capacity_bytes()
    if block_g is None:
        block_g = _pick_block_g(g_total, c_in, c_out, s_dim,
                                jnp.dtype(x_cgs.dtype).itemsize,
                                budget_bytes=vmem_cap // 4)
    else:
        block_g = min(_round_up(max(int(block_g), 1), 8), g_total)

    grid = (pl.cdiv(g_total, block_g),)                           # partial tail block OK

    out = pl.pallas_call(
        functools.partial(_nonequi_attn_kernel, d=d),
        out_shape=jax.ShapeDtypeStruct((c_out, g_total, s_dim), x_cgs.dtype),
        grid=grid,
        in_specs=[
            pl.BlockSpec((c_in, block_g, s_dim), lambda g: (0, g, 0)),   # x (dense tiles)
            pl.BlockSpec(a1.shape, lambda g: (0, 0)),                    # folded score matrix
            pl.BlockSpec(wb.shape, lambda g: (0, 0)),                    # folded output matrix
        ],
        out_specs=pl.BlockSpec((c_out, block_g, s_dim), lambda g: (0, g, 0)),
        compiler_params=pltpu.CompilerParams(
            dimension_semantics=("parallel",),                    # independent (b, m) tiles
            vmem_limit_bytes=min((vmem_cap * 3) // 4, 96 * 1024 * 1024),
        ),
    )(x_cgs, a1, wb)
    return out


def nonequi_channels_attention_bscm(x, params, **kw):
    """Convenience wrapper for the PyTorch layout (B, S, Cin, M) -> (B, S, Cout, M).

    NOTE: this performs two XLA relayouts (extra HBM traffic); production callers should
    keep activations in the native (Cin, G, S) layout and call nonequi_channels_attention.
    """
    b, s, c_in, m = x.shape
    x_cgs = jnp.transpose(x, (2, 0, 3, 1)).reshape(c_in, b * m, s)
    y = nonequi_channels_attention(x_cgs, params, **kw)
    c_out = y.shape[0]
    return jnp.transpose(y.reshape(c_out, b, m, s), (1, 3, 0, 2))


# -------------------------------------------------------------------------- reference ---
def reference(x, params):
    """Pure-JAX mirror of the PyTorch forward (PyTorch layout, for verification)."""
    wq, wk, wv, wo = params['wq'], params['wk'], params['wv'], params['wo']
    bq, bk, bv, bo = params['bq'], params['bk'], params['bv'], params['bo']

    def mvlinear(t, w, b):                                     # t: (B, S, Ci, M)
        return jnp.einsum('oi,bsim->bsom', w, t) + b[None, None, :, None]

    q = mvlinear(x, wq, bq)
    k = mvlinear(x, wk, bk)
    v = mvlinear(x, wv, bv)
    vp = jnp.transpose(v, (0, 3, 1, 2))                        # (B, M, S, D)
    kp = jnp.transpose(k, (0, 3, 1, 2))                        # (B, M, S, D)
    qp = jnp.transpose(q, (0, 3, 2, 1))                        # (B, M, D, S)
    qk = jnp.einsum('bmcs,bmsC->bmcC', qp, kp)                 # Q @ K_T
    a = jax.nn.softmax(qk, axis=-1)
    out = jnp.einsum('bmcC,bmsC->bsCm', a, vp)                 # 'c' contracted
    return mvlinear(out, wo, bo)


def init_params(key, in_channels, out_channels, n_heads):
    d = out_channels * n_heads
    ks = jax.random.split(key, 8)
    s_in = 1.0 / np.sqrt(in_channels)
    s_d = 1.0 / np.sqrt(d)
    return {
        'wq': jax.random.normal(ks[0], (d, in_channels), jnp.float32) * s_in,
        'wk': jax.random.normal(ks[1], (d, in_channels), jnp.float32) * s_in,
        'wv': jax.random.normal(ks[2], (d, in_channels), jnp.float32) * s_in,
        'wo': jax.random.normal(ks[3], (out_channels, d), jnp.float32) * s_d,
        'bq': jax.random.normal(ks[4], (d,), jnp.float32) * 0.1,
        'bk': jax.random.normal(ks[5], (d,), jnp.float32) * 0.1,
        'bv': jax.random.normal(ks[6], (d,), jnp.float32) * 0.1,
        'bo': jax.random.normal(ks[7], (out_channels,), jnp.float32) * 0.1,
    }


if __name__ == "__main__":
    # batch, sequence, in-channels, multivector components; S=128 -> full 128-lane tiles,
    # G = B*M = 32 -> two "parallel" grid steps (v7x megacore gets both TensorCores busy).
    B, S, C_IN, M = 4, 128, 4, 8
    C_OUT, N_HEADS = 4, 2                      # projection width D = 8
    G = B * M

    key = jax.random.PRNGKey(0)
    kx, kp = jax.random.split(key)
    params = init_params(kp, C_IN, C_OUT, N_HEADS)

    # Native layout input (production path: no host transposes anywhere).
    x_native = jax.random.normal(kx, (C_IN, G, S), jnp.float32)

    run = jax.jit(functools.partial(nonequi_channels_attention, params=params))
    y_native = jax.block_until_ready(run(x_native))
    assert y_native.shape == (C_OUT, G, S)

    # Verification against the PyTorch-faithful reference (layout conversion in test code only).
    x_pt = jnp.transpose(x_native.reshape(C_IN, B, M, S), (1, 3, 0, 2))   # (B, S, Cin, M)
    y_ref_pt = jax.block_until_ready(reference(x_pt, params))
    y_ref_native = jnp.transpose(y_ref_pt, (2, 0, 3, 1)).reshape(C_OUT, G, S)
    np.testing.assert_allclose(np.asarray(y_native), np.asarray(y_ref_native),
                               rtol=1e-3, atol=1e-3)

    # Also exercise the PyTorch-layout convenience wrapper.
    y_pt = jax.block_until_ready(
        jax.jit(functools.partial(nonequi_channels_attention_bscm, params=params))(x_pt))
    np.testing.assert_allclose(np.asarray(y_pt), np.asarray(y_ref_pt), rtol=1e-3, atol=1e-3)

    print("KERNEL_OK")
</pallas_src>

<mosaic_0001>
module attributes {stable_mosaic.version = 11 : i64} {
  func.func @_nonequi_attn_kernel(%arg0: i32, %arg1: memref<4x16x128xf32, #tpu.memory_space<vmem>>, %arg2: memref<15x64xf32, #tpu.memory_space<vmem>>, %arg3: memref<9x20xf32, #tpu.memory_space<vmem>>, %arg4: memref<4x16x128xf32, #tpu.memory_space<vmem>>) attributes {dimension_semantics = [#tpu.dimension_semantics<parallel>], iteration_bounds = array<i64: 2>, scalar_prefetch = 0 : i64, scratch_operands = 0 : i64, tpu.core_type = #tpu.core_type<tc>, window_params = [{transform_indices = @transform_0, window_bounds = array<i64: 4, 16, 128>}, {pipeline_mode = #tpu.pipeline_mode<synchronous>, transform_indices = @transform_1, window_bounds = array<i64: 15, 64>}, {pipeline_mode = #tpu.pipeline_mode<synchronous>, transform_indices = @transform_2, window_bounds = array<i64: 9, 20>}, {transform_indices = @transform_3, window_bounds = array<i64: 4, 16, 128>}]} {
    %c0 = arith.constant 0 : index
    %c0_0 = arith.constant 0 : index
    %c0_1 = arith.constant 0 : index
    %0 = vector.load %arg1[%c0, %c0_0, %c0_1] : memref<4x16x128xf32, #tpu.memory_space<vmem>>, vector<4x16x128xf32>
    %1 = vector.extract_strided_slice %0 {offsets = [0, 0, 0], sizes = [1, 16, 128], strides = [1, 1, 1]} : vector<4x16x128xf32> to vector<1x16x128xf32>
    %2 = vector.shape_cast %1 : vector<1x16x128xf32> to vector<16x128xf32>
    %3 = vector.extract_strided_slice %0 {offsets = [0, 0, 0], sizes = [1, 16, 128], strides = [1, 1, 1]} : vector<4x16x128xf32> to vector<1x16x128xf32>
    %4 = vector.shape_cast %3 : vector<1x16x128xf32> to vector<16x128xf32>
    %5 = arith.mulf %2, %4 : vector<16x128xf32>
    %cst = arith.constant dense<0.000000e+00> : vector<16xf32>
    %6 = vector.multi_reduction <add>, %5, %cst [1] : vector<16x128xf32> to vector<16xf32>
    %7 = vector.shape_cast %6 : vector<16xf32> to vector<16x1xf32>
    %8 = vector.extract_strided_slice %0 {offsets = [0, 0, 0], sizes = [1, 16, 128], strides = [1, 1, 1]} : vector<4x16x128xf32> to vector<1x16x128xf32>
    %9 = vector.shape_cast %8 : vector<1x16x128xf32> to vector<16x128xf32>
    %10 = vector.extract_strided_slice %0 {offsets = [1, 0, 0], sizes = [1, 16, 128], strides = [1, 1, 1]} : vector<4x16x128xf32> to vector<1x16x128xf32>
    %11 = vector.shape_cast %10 : vector<1x16x128xf32> to vector<16x128xf32>
    %12 = arith.mulf %9, %11 : vector<16x128xf32>
    %cst_2 = arith.constant dense<0.000000e+00> : vector<16xf32>
    %13 = vector.multi_reduction <add>, %12, %cst_2 [1] : vector<16x128xf32> to vector<16xf32>
    %14 = vector.shape_cast %13 : vector<16xf32> to vector<16x1xf32>
    %15 = vector.extract_strided_slice %0 {offsets = [0, 0, 0], sizes = [1, 16, 128], strides = [1, 1, 1]} : vector<4x16x128xf32> to vector<1x16x128xf32>
    %16 = vector.shape_cast %15 : vector<1x16x128xf32> to vector<16x128xf32>
    %17 = vector.extract_strided_slice %0 {offsets = [2, 0, 0], sizes = [1, 16, 128], strides = [1, 1, 1]} : vector<4x16x128xf32> to vector<1x16x128xf32>
    %18 = vector.shape_cast %17 : vector<1x16x128xf32> to vector<16x128xf32>
    %19 = arith.mulf %16, %18 : vector<16x128xf32>
    %cst_3 = arith.constant dense<0.000000e+00> : vector<16xf32>
    %20 = vector.multi_reduction <add>, %19, %cst_3 [1] : vector<16x128xf32> to vector<16xf32>
    %21 = vector.shape_cast %20 : vector<16xf32> to vector<16x1xf32>
    %22 = vector.extract_strided_slice %0 {offsets = [0, 0, 0], sizes = [1, 16, 128], strides = [1, 1, 1]} : vector<4x16x128xf32> to vector<1x16x128xf32>
    %23 = vector.shape_cast %22 : vector<1x16x128xf32> to vector<16x128xf32>
    %24 = vector.extract_strided_slice %0 {offsets = [3, 0, 0], sizes = [1, 16, 128], strides = [1, 1, 1]} : vector<4x16x128xf32> to vector<1x16x128xf32>
    %25 = vector.shape_cast %24 : vector<1x16x128xf32> to vector<16x128xf32>
    %26 = arith.mulf %23, %25 : vector<16x128xf32>
    %cst_4 = arith.constant dense<0.000000e+00> : vector<16xf32>
    %27 = vector.multi_reduction <add>, %26, %cst_4 [1] : vector<16x128xf32> to vector<16xf32>
    %28 = vector.shape_cast %27 : vector<16xf32> to vector<16x1xf32>
    %29 = vector.extract_strided_slice %0 {offsets = [1, 0, 0], sizes = [1, 16, 128], strides = [1, 1, 1]} : vector<4x16x128xf32> to vector<1x16x128xf32>
    %30 = vector.shape_cast %29 : vector<1x16x128xf32> to vector<16x128xf32>
    %31 = vector.extract_strided_slice %0 {offsets = [1, 0, 0], sizes = [1, 16, 128], strides = [1, 1, 1]} : vector<4x16x128xf32> to vector<1x16x128xf32>
    %32 = vector.shape_cast %31 : vector<1x16x128xf32> to vector<16x128xf32>
    %33 = arith.mulf %30, %32 : vector<16x128xf32>
    %cst_5 = arith.constant dense<0.000000e+00> : vector<16xf32>
    %34 = vector.multi_reduction <add>, %33, %cst_5 [1] : vector<16x128xf32> to vector<16xf32>
    %35 = vector.shape_cast %34 : vector<16xf32> to vector<16x1xf32>
    %36 = vector.extract_strided_slice %0 {offsets = [1, 0, 0], sizes = [1, 16, 128], strides = [1, 1, 1]} : vector<4x16x128xf32> to vector<1x16x128xf32>
    %37 = vector.shape_cast %36 : vector<1x16x128xf32> to vector<16x128xf32>
    %38 = vector.extract_strided_slice %0 {offsets = [2, 0, 0], sizes = [1, 16, 128], strides = [1, 1, 1]} : vector<4x16x128xf32> to vector<1x16x128xf32>
    %39 = vector.shape_cast %38 : vector<1x16x128xf32> to vector<16x128xf32>
    %40 = arith.mulf %37, %39 : vector<16x128xf32>
    %cst_6 = arith.constant dense<0.000000e+00> : vector<16xf32>
    %41 = vector.multi_reduction <add>, %40, %cst_6 [1] : vector<16x128xf32> to vector<16xf32>
    %42 = vector.shape_cast %41 : vector<16xf32> to vector<16x1xf32>
    %43 = vector.extract_strided_slice %0 {offsets = [1, 0, 0], sizes = [1, 16, 128], strides = [1, 1, 1]} : vector<4x16x128xf32> to vector<1x16x128xf32>
    %44 = vector.shape_cast %43 : vector<1x16x128xf32> to vector<16x128xf32>
    %45 = vector.extract_strided_slice %0 {offsets = [3, 0, 0], sizes = [1, 16, 128], strides = [1, 1, 1]} : vector<4x16x128xf32> to vector<1x16x128xf32>
    %46 = vector.shape_cast %45 : vector<1x16x128xf32> to vector<16x128xf32>
    %47 = arith.mulf %44, %46 : vector<16x128xf32>
    %cst_7 = arith.constant dense<0.000000e+00> : vector<16xf32>
    %48 = vector.multi_reduction <add>, %47, %cst_7 [1] : vector<16x128xf32> to vector<16xf32>
    %49 = vector.shape_cast %48 : vector<16xf32> to vector<16x1xf32>
    %50 = vector.extract_strided_slice %0 {offsets = [2, 0, 0], sizes = [1, 16, 128], strides = [1, 1, 1]} : vector<4x16x128xf32> to vector<1x16x128xf32>
    %51 = vector.shape_cast %50 : vector<1x16x128xf32> to vector<16x128xf32>
    %52 = vector.extract_strided_slice %0 {offsets = [2, 0, 0], sizes = [1, 16, 128], strides = [1, 1, 1]} : vector<4x16x128xf32> to vector<1x16x128xf32>
    %53 = vector.shape_cast %52 : vector<1x16x128xf32> to vector<16x128xf32>
    %54 = arith.mulf %51, %53 : vector<16x128xf32>
    %cst_8 = arith.constant dense<0.000000e+00> : vector<16xf32>
    %55 = vector.multi_reduction <add>, %54, %cst_8 [1] : vector<16x128xf32> to vector<16xf32>
    %56 = vector.shape_cast %55 : vector<16xf32> to vector<16x1xf32>
    %57 = vector.extract_strided_slice %0 {offsets = [2, 0, 0], sizes = [1, 16, 128], strides = [1, 1, 1]} : vector<4x16x128xf32> to vector<1x16x128xf32>
    %58 = vector.shape_cast %57 : vector<1x16x128xf32> to vector<16x128xf32>
    %59 = vector.extract_strided_slice %0 {offsets = [3, 0, 0], sizes = [1, 16, 128], strides = [1, 1, 1]} : vector<4x16x128xf32> to vector<1x16x128xf32>
    %60 = vector.shape_cast %59 : vector<1x16x128xf32> to vector<16x128xf32>
    %61 = arith.mulf %58, %60 : vector<16x128xf32>
    %cst_9 = arith.constant dense<0.000000e+00> : vector<16xf32>
    %62 = vector.multi_reduction <add>, %61, %cst_9 [1] : vector<16x128xf32> to vector<16xf32>
    %63 = vector.shape_cast %62 : vector<16xf32> to vector<16x1xf32>
    %64 = vector.extract_strided_slice %0 {offsets = [3, 0, 0], sizes = [1, 16, 128], strides = [1, 1, 1]} : vector<4x16x128xf32> to vector<1x16x128xf32>
    %65 = vector.shape_cast %64 : vector<1x16x128xf32> to vector<16x128xf32>
    %66 = vector.extract_strided_slice %0 {offsets = [3, 0, 0], sizes = [1, 16, 128], strides = [1, 1, 1]} : vector<4x16x128xf32> to vector<1x16x128xf32>
    %67 = vector.shape_cast %66 : vector<1x16x128xf32> to vector<16x128xf32>
    %68 = arith.mulf %65, %67 : vector<16x128xf32>
    %cst_10 = arith.constant dense<0.000000e+00> : vector<16xf32>
    %69 = vector.multi_reduction <add>, %68, %cst_10 [1] : vector<16x128xf32> to vector<16xf32>
    %70 = vector.shape_cast %69 : vector<16xf32> to vector<16x1xf32>
    %71 = vector.extract_strided_slice %0 {offsets = [0, 0, 0], sizes = [1, 16, 128], strides = [1, 1, 1]} : vector<4x16x128xf32> to vector<1x16x128xf32>
    %72 = vector.shape_cast %71 : vector<1x16x128xf32> to vector<16x128xf32>
    %cst_11 = arith.constant dense<0.000000e+00> : vector<16xf32>
    %73 = vector.multi_reduction <add>, %72, %cst_11 [1] : vector<16x128xf32> to vector<16xf32>
    %74 = vector.shape_cast %73 : vector<16xf32> to vector<16x1xf32>
    %75 = vector.extract_strided_slice %0 {offsets = [1, 0, 0], sizes = [1, 16, 128], strides = [1, 1, 1]} : vector<4x16x128xf32> to vector<1x16x128xf32>
    %76 = vector.shape_cast %75 : vector<1x16x128xf32> to vector<16x128xf32>
    %cst_12 = arith.constant dense<0.000000e+00> : vector<16xf32>
    %77 = vector.multi_reduction <add>, %76, %cst_12 [1] : vector<16x128xf32> to vector<16xf32>
    %78 = vector.shape_cast %77 : vector<16xf32> to vector<16x1xf32>
    %79 = vector.extract_strided_slice %0 {offsets = [2, 0, 0], sizes = [1, 16, 128], strides = [1, 1, 1]} : vector<4x16x128xf32> to vector<1x16x128xf32>
    %80 = vector.shape_cast %79 : vector<1x16x128xf32> to vector<16x128xf32>
    %cst_13 = arith.constant dense<0.000000e+00> : vector<16xf32>
    %81 = vector.multi_reduction <add>, %80, %cst_13 [1] : vector<16x128xf32> to vector<16xf32>
    %82 = vector.shape_cast %81 : vector<16xf32> to vector<16x1xf32>
    %83 = vector.extract_strided_slice %0 {offsets = [3, 0, 0], sizes = [1, 16, 128], strides = [1, 1, 1]} : vector<4x16x128xf32> to vector<1x16x128xf32>
    %84 = vector.shape_cast %83 : vector<1x16x128xf32> to vector<16x128xf32>
    %cst_14 = arith.constant dense<0.000000e+00> : vector<16xf32>
    %85 = vector.multi_reduction <add>, %84, %cst_14 [1] : vector<16x128xf32> to vector<16xf32>
    %86 = vector.shape_cast %85 : vector<16xf32> to vector<16x1xf32>
    %cst_15 = arith.constant 1.000000e+00 : f32
    %87 = vector.broadcast %cst_15 : f32 to vector<16x1xf32>
    %88 = tpu.concatenate %7, %14, %21, %28, %35, %42, %49, %56, %63, %70, %74, %78, %82, %86, %87 in 1 : vector<16x1xf32>, vector<16x1xf32>, vector<16x1xf32>, vector<16x1xf32>, vector<16x1xf32>, vector<16x1xf32>, vector<16x1xf32>, vector<16x1xf32>, vector<16x1xf32>, vector<16x1xf32>, vector<16x1xf32>, vector<16x1xf32>, vector<16x1xf32>, vector<16x1xf32>, vector<16x1xf32> -> vector<16x15xf32>
    %c0_16 = arith.constant 0 : index
    %c0_17 = arith.constant 0 : index
    %89 = vector.load %arg2[%c0_16, %c0_17] : memref<15x64xf32, #tpu.memory_space<vmem>>, vector<15x64xf32>
    %cst_18 = arith.constant dense<0.000000e+00> : vector<16x64xf32>
    %90 = tpu.matmul %88, %89, %cst_18 {dimension_numbers = #tpu.dot_dimension_numbers<[1], [0], [0], [1], [0, 0, 1, 1], [], []>} : vector<16x15xf32>, vector<15x64xf32>, vector<16x64xf32> -> vector<16x64xf32>
    %cst_19 = arith.constant 0.000000e+00 : f32
    %91 = vector.broadcast %cst_19 : f32 to vector<16x8xf32>
    %92 = vector.extract_strided_slice %90 {offsets = [0, 0], sizes = [16, 8], strides = [1, 1]} : vector<16x64xf32> to vector<16x8xf32>
    %cst_20 = arith.constant dense<0xFF800000> : vector<16xf32>
    %93 = vector.multi_reduction <maximumf>, %92, %cst_20 [1] : vector<16x8xf32> to vector<16xf32>
    %94 = vector.shape_cast %93 : vector<16xf32> to vector<16x1xf32>
    %95 = vector.broadcast %94 : vector<16x1xf32> to vector<16x8xf32>
    %96 = arith.subf %92, %95 : vector<16x8xf32>
    %97 = math.exp %96 : vector<16x8xf32>
    %cst_21 = arith.constant dense<0.000000e+00> : vector<16xf32>
    %98 = vector.multi_reduction <add>, %97, %cst_21 [1] : vector<16x8xf32> to vector<16xf32>
    %99 = vector.shape_cast %98 : vector<16xf32> to vector<16x1xf32>
    %100 = vector.broadcast %99 : vector<16x1xf32> to vector<16x8xf32>
    %101 = arith.divf %97, %100 : vector<16x8xf32>
    %102 = arith.addf %91, %101 : vector<16x8xf32>
    %103 = vector.extract_strided_slice %90 {offsets = [0, 8], sizes = [16, 8], strides = [1, 1]} : vector<16x64xf32> to vector<16x8xf32>
    %cst_22 = arith.constant dense<0xFF800000> : vector<16xf32>
    %104 = vector.multi_reduction <maximumf>, %103, %cst_22 [1] : vector<16x8xf32> to vector<16xf32>
    %105 = vector.shape_cast %104 : vector<16xf32> to vector<16x1xf32>
    %106 = vector.broadcast %105 : vector<16x1xf32> to vector<16x8xf32>
    %107 = arith.subf %103, %106 : vector<16x8xf32>
    %108 = math.exp %107 : vector<16x8xf32>
    %cst_23 = arith.constant dense<0.000000e+00> : vector<16xf32>
    %109 = vector.multi_reduction <add>, %108, %cst_23 [1] : vector<16x8xf32> to vector<16xf32>
    %110 = vector.shape_cast %109 : vector<16xf32> to vector<16x1xf32>
    %111 = vector.broadcast %110 : vector<16x1xf32> to vector<16x8xf32>
    %112 = arith.divf %108, %111 : vector<16x8xf32>
    %113 = arith.addf %102, %112 : vector<16x8xf32>
    %114 = vector.extract_strided_slice %90 {offsets = [0, 16], sizes = [16, 8], strides = [1, 1]} : vector<16x64xf32> to vector<16x8xf32>
    %cst_24 = arith.constant dense<0xFF800000> : vector<16xf32>
    %115 = vector.multi_reduction <maximumf>, %114, %cst_24 [1] : vector<16x8xf32> to vector<16xf32>
    %116 = vector.shape_cast %115 : vector<16xf32> to vector<16x1xf32>
    %117 = vector.broadcast %116 : vector<16x1xf32> to vector<16x8xf32>
    %118 = arith.subf %114, %117 : vector<16x8xf32>
    %119 = math.exp %118 : vector<16x8xf32>
    %cst_25 = arith.constant dense<0.000000e+00> : vector<16xf32>
    %120 = vector.multi_reduction <add>, %119, %cst_25 [1] : vector<16x8xf32> to vector<16xf32>
    %121 = vector.shape_cast %120 : vector<16xf32> to vector<16x1xf32>
    %122 = vector.broadcast %121 : vector<16x1xf32> to vector<16x8xf32>
    %123 = arith.divf %119, %122 : vector<16x8xf32>
    %124 = arith.addf %113, %123 : vector<16x8xf32>
    %125 = vector.extract_strided_slice %90 {offsets = [0, 24], sizes = [16, 8], strides = [1, 1]} : vector<16x64xf32> to vector<16x8xf32>
    %cst_26 = arith.constant dense<0xFF800000> : vector<16xf32>
    %126 = vector.multi_reduction <maximumf>, %125, %cst_26 [1] : vector<16x8xf32> to vector<16xf32>
    %127 = vector.shape_cast %126 : vector<16xf32> to vector<16x1xf32>
    %128 = vector.broadcast %127 : vector<16x1xf32> to vector<16x8xf32>
    %129 = arith.subf %125, %128 : vector<16x8xf32>
    %130 = math.exp %129 : vector<16x8xf32>
    %cst_27 = arith.constant dense<0.000000e+00> : vector<16xf32>
    %131 = vector.multi_reduction <add>, %130, %cst_27 [1] : vector<16x8xf32> to vector<16xf32>
    %132 = vector.shape_cast %131 : vector<16xf32> to vector<16x1xf32>
    %133 = vector.broadcast %132 : vector<16x1xf32> to vector<16x8xf32>
    %134 = arith.divf %130, %133 : vector<16x8xf32>
    %135 = arith.addf %124, %134 : vector<16x8xf32>
    %136 = vector.extract_strided_slice %90 {offsets = [0, 32], sizes = [16, 8], strides = [1, 1]} : vector<16x64xf32> to vector<16x8xf32>
    %cst_28 = arith.constant dense<0xFF800000> : vector<16xf32>
    %137 = vector.multi_reduction <maximumf>, %136, %cst_28 [1] : vector<16x8xf32> to vector<16xf32>
    %138 = vector.shape_cast %137 : vector<16xf32> to vector<16x1xf32>
    %139 = vector.broadcast %138 : vector<16x1xf32> to vector<16x8xf32>
    %140 = arith.subf %136, %139 : vector<16x8xf32>
    %141 = math.exp %140 : vector<16x8xf32>
    %cst_29 = arith.constant dense<0.000000e+00> : vector<16xf32>
    %142 = vector.multi_reduction <add>, %141, %cst_29 [1] : vector<16x8xf32> to vector<16xf32>
    %143 = vector.shape_cast %142 : vector<16xf32> to vector<16x1xf32>
    %144 = vector.broadcast %143 : vector<16x1xf32> to vector<16x8xf32>
    %145 = arith.divf %141, %144 : vector<16x8xf32>
    %146 = arith.addf %135, %145 : vector<16x8xf32>
    %147 = vector.extract_strided_slice %90 {offsets = [0, 40], sizes = [16, 8], strides = [1, 1]} : vector<16x64xf32> to vector<16x8xf32>
    %cst_30 = arith.constant dense<0xFF800000> : vector<16xf32>
    %148 = vector.multi_reduction <maximumf>, %147, %cst_30 [1] : vector<16x8xf32> to vector<16xf32>
    %149 = vector.shape_cast %148 : vector<16xf32> to vector<16x1xf32>
    %150 = vector.broadcast %149 : vector<16x1xf32> to vector<16x8xf32>
    %151 = arith.subf %147, %150 : vector<16x8xf32>
    %152 = math.exp %151 : vector<16x8xf32>
    %cst_31 = arith.constant dense<0.000000e+00> : vector<16xf32>
    %153 = vector.multi_reduction <add>, %152, %cst_31 [1] : vector<16x8xf32> to vector<16xf32>
    %154 = vector.shape_cast %153 : vector<16xf32> to vector<16x1xf32>
    %155 = vector.broadcast %154 : vector<16x1xf32> to vector<16x8xf32>
    %156 = arith.divf %152, %155 : vector<16x8xf32>
    %157 = arith.addf %146, %156 : vector<16x8xf32>
    %158 = vector.extract_strided_slice %90 {offsets = [0, 48], sizes = [16, 8], strides = [1, 1]} : vector<16x64xf32> to vector<16x8xf32>
    %cst_32 = arith.constant dense<0xFF800000> : vector<16xf32>
    %159 = vector.multi_reduction <maximumf>, %158, %cst_32 [1] : vector<16x8xf32> to vector<16xf32>
    %160 = vector.shape_cast %159 : vector<16xf32> to vector<16x1xf32>
    %161 = vector.broadcast %160 : vector<16x1xf32> to vector<16x8xf32>
    %162 = arith.subf %158, %161 : vector<16x8xf32>
    %163 = math.exp %162 : vector<16x8xf32>
    %cst_33 = arith.constant dense<0.000000e+00> : vector<16xf32>
    %164 = vector.multi_reduction <add>, %163, %cst_33 [1] : vector<16x8xf32> to vector<16xf32>
    %165 = vector.shape_cast %164 : vector<16xf32> to vector<16x1xf32>
    %166 = vector.broadcast %165 : vector<16x1xf32> to vector<16x8xf32>
    %167 = arith.divf %163, %166 : vector<16x8xf32>
    %168 = arith.addf %157, %167 : vector<16x8xf32>
    %169 = vector.extract_strided_slice %90 {offsets = [0, 56], sizes = [16, 8], strides = [1, 1]} : vector<16x64xf32> to vector<16x8xf32>
    %cst_34 = arith.constant dense<0xFF800000> : vector<16xf32>
    %170 = vector.multi_reduction <maximumf>, %169, %cst_34 [1] : vector<16x8xf32> to vector<16xf32>
    %171 = vector.shape_cast %170 : vector<16xf32> to vector<16x1xf32>
    %172 = vector.broadcast %171 : vector<16x1xf32> to vector<16x8xf32>
    %173 = arith.subf %169, %172 : vector<16x8xf32>
    %174 = math.exp %173 : vector<16x8xf32>
    %cst_35 = arith.constant dense<0.000000e+00> : vector<16xf32>
    %175 = vector.multi_reduction <add>, %174, %cst_35 [1] : vector<16x8xf32> to vector<16xf32>
    %176 = vector.shape_cast %175 : vector<16xf32> to vector<16x1xf32>
    %177 = vector.broadcast %176 : vector<16x1xf32> to vector<16x8xf32>
    %178 = arith.divf %174, %177 : vector<16x8xf32>
    %179 = arith.addf %168, %178 : vector<16x8xf32>
    %180 = tpu.concatenate %179, %87 in 1 : vector<16x8xf32>, vector<16x1xf32> -> vector<16x9xf32>
    %c0_36 = arith.constant 0 : index
    %c0_37 = arith.constant 0 : index
    %181 = vector.load %arg3[%c0_36, %c0_37] : memref<9x20xf32, #tpu.memory_space<vmem>>, vector<9x20xf32>
    %cst_38 = arith.constant dense<0.000000e+00> : vector<16x20xf32>
    %182 = tpu.matmul %180, %181, %cst_38 {dimension_numbers = #tpu.dot_dimension_numbers<[1], [0], [0], [1], [0, 0, 1, 1], [], []>} : vector<16x9xf32>, vector<9x20xf32>, vector<16x20xf32> -> vector<16x20xf32>
    %183 = vector.extract_strided_slice %182 {offsets = [0, 16], sizes = [16, 1], strides = [1, 1]} : vector<16x20xf32> to vector<16x1xf32>
    %184 = vector.extract_strided_slice %182 {offsets = [0, 0], sizes = [16, 1], strides = [1, 1]} : vector<16x20xf32> to vector<16x1xf32>
    %185 = vector.extract_strided_slice %0 {offsets = [0, 0, 0], sizes = [1, 16, 128], strides = [1, 1, 1]} : vector<4x16x128xf32> to vector<1x16x128xf32>
    %186 = vector.shape_cast %185 : vector<1x16x128xf32> to vector<16x128xf32>
    %187 = vector.broadcast %184 : vector<16x1xf32> to vector<16x128xf32>
    %188 = arith.mulf %187, %186 : vector<16x128xf32>
    %189 = vector.broadcast %183 : vector<16x1xf32> to vector<16x128xf32>
    %190 = arith.addf %189, %188 : vector<16x128xf32>
    %191 = vector.extract_strided_slice %182 {offsets = [0, 1], sizes = [16, 1], strides = [1, 1]} : vector<16x20xf32> to vector<16x1xf32>
    %192 = vector.extract_strided_slice %0 {offsets = [1, 0, 0], sizes = [1, 16, 128], strides = [1, 1, 1]} : vector<4x16x128xf32> to vector<1x16x128xf32>
    %193 = vector.shape_cast %192 : vector<1x16x128xf32> to vector<16x128xf32>
    %194 = vector.broadcast %191 : vector<16x1xf32> to vector<16x128xf32>
    %195 = arith.mulf %194, %193 : vector<16x128xf32>
    %196 = arith.addf %190, %195 : vector<16x128xf32>
    %197 = vector.extract_strided_slice %182 {offsets = [0, 2], sizes = [16, 1], strides = [1, 1]} : vector<16x20xf32> to vector<16x1xf32>
    %198 = vector.extract_strided_slice %0 {offsets = [2, 0, 0], sizes = [1, 16, 128], strides = [1, 1, 1]} : vector<4x16x128xf32> to vector<1x16x128xf32>
    %199 = vector.shape_cast %198 : vector<1x16x128xf32> to vector<16x128xf32>
    %200 = vector.broadcast %197 : vector<16x1xf32> to vector<16x128xf32>
    %201 = arith.mulf %200, %199 : vector<16x128xf32>
    %202 = arith.addf %196, %201 : vector<16x128xf32>
    %203 = vector.extract_strided_slice %182 {offsets = [0, 3], sizes = [16, 1], strides = [1, 1]} : vector<16x20xf32> to vector<16x1xf32>
    %204 = vector.extract_strided_slice %0 {offsets = [3, 0, 0], sizes = [1, 16, 128], strides = [1, 1, 1]} : vector<4x16x128xf32> to vector<1x16x128xf32>
    %205 = vector.shape_cast %204 : vector<1x16x128xf32> to vector<16x128xf32>
    %206 = vector.broadcast %203 : vector<16x1xf32> to vector<16x128xf32>
    %207 = arith.mulf %206, %205 : vector<16x128xf32>
    %208 = arith.addf %202, %207 : vector<16x128xf32>
    %c0_39 = arith.constant 0 : index
    %c0_40 = arith.constant 0 : index
    %c0_41 = arith.constant 0 : index
    %209 = vector.load %arg4[%c0_39, %c0_40, %c0_41] : memref<4x16x128xf32, #tpu.memory_space<vmem>>, vector<1x16x128xf32>
    %210 = vector.shape_cast %209 : vector<1x16x128xf32> to vector<16x128xf32>
    %211 = vector.shape_cast %208 : vector<16x128xf32> to vector<1x16x128xf32>
    tpu.vector_store %arg4[%c0_39, %c0_40, %c0_41], %211 {strides = array<i32>} : memref<4x16x128xf32, #tpu.memory_space<vmem>>, vector<1x16x128xf32>,
    %212 = vector.extract_strided_slice %182 {offsets = [0, 17], sizes = [16, 1], strides = [1, 1]} : vector<16x20xf32> to vector<16x1xf32>
    %213 = vector.extract_strided_slice %182 {offsets = [0, 4], sizes = [16, 1], strides = [1, 1]} : vector<16x20xf32> to vector<16x1xf32>
    %214 = vector.extract_strided_slice %0 {offsets = [0, 0, 0], sizes = [1, 16, 128], strides = [1, 1, 1]} : vector<4x16x128xf32> to vector<1x16x128xf32>
    %215 = vector.shape_cast %214 : vector<1x16x128xf32> to vector<16x128xf32>
    %216 = vector.broadcast %213 : vector<16x1xf32> to vector<16x128xf32>
    %217 = arith.mulf %216, %215 : vector<16x128xf32>
    %218 = vector.broadcast %212 : vector<16x1xf32> to vector<16x128xf32>
    %219 = arith.addf %218, %217 : vector<16x128xf32>
    %220 = vector.extract_strided_slice %182 {offsets = [0, 5], sizes = [16, 1], strides = [1, 1]} : vector<16x20xf32> to vector<16x1xf32>
    %221 = vector.extract_strided_slice %0 {offsets = [1, 0, 0], sizes = [1, 16, 128], strides = [1, 1, 1]} : vector<4x16x128xf32> to vector<1x16x128xf32>
    %222 = vector.shape_cast %221 : vector<1x16x128xf32> to vector<16x128xf32>
    %223 = vector.broadcast %220 : vector<16x1xf32> to vector<16x128xf32>
    %224 = arith.mulf %223, %222 : vector<16x128xf32>
    %225 = arith.addf %219, %224 : vector<16x128xf32>
    %226 = vector.extract_strided_slice %182 {offsets = [0, 6], sizes = [16, 1], strides = [1, 1]} : vector<16x20xf32> to vector<16x1xf32>
    %227 = vector.extract_strided_slice %0 {offsets = [2, 0, 0], sizes = [1, 16, 128], strides = [1, 1, 1]} : vector<4x16x128xf32> to vector<1x16x128xf32>
    %228 = vector.shape_cast %227 : vector<1x16x128xf32> to vector<16x128xf32>
    %229 = vector.broadcast %226 : vector<16x1xf32> to vector<16x128xf32>
    %230 = arith.mulf %229, %228 : vector<16x128xf32>
    %231 = arith.addf %225, %230 : vector<16x128xf32>
    %232 = vector.extract_strided_slice %182 {offsets = [0, 7], sizes = [16, 1], strides = [1, 1]} : vector<16x20xf32> to vector<16x1xf32>
    %233 = vector.extract_strided_slice %0 {offsets = [3, 0, 0], sizes = [1, 16, 128], strides = [1, 1, 1]} : vector<4x16x128xf32> to vector<1x16x128xf32>
    %234 = vector.shape_cast %233 : vector<1x16x128xf32> to vector<16x128xf32>
    %235 = vector.broadcast %232 : vector<16x1xf32> to vector<16x128xf32>
    %236 = arith.mulf %235, %234 : vector<16x128xf32>
    %237 = arith.addf %231, %236 : vector<16x128xf32>
    %c1 = arith.constant 1 : index
    %c0_42 = arith.constant 0 : index
    %c0_43 = arith.constant 0 : index
    %238 = vector.load %arg4[%c1, %c0_42, %c0_43] : memref<4x16x128xf32, #tpu.memory_space<vmem>>, vector<1x16x128xf32>
    %239 = vector.shape_cast %238 : vector<1x16x128xf32> to vector<16x128xf32>
    %240 = vector.shape_cast %237 : vector<16x128xf32> to vector<1x16x128xf32>
    tpu.vector_store %arg4[%c1, %c0_42, %c0_43], %240 {strides = array<i32>} : memref<4x16x128xf32, #tpu.memory_space<vmem>>, vector<1x16x128xf32>,
    %241 = vector.extract_strided_slice %182 {offsets = [0, 18], sizes = [16, 1], strides = [1, 1]} : vector<16x20xf32> to vector<16x1xf32>
    %242 = vector.extract_strided_slice %182 {offsets = [0, 8], sizes = [16, 1], strides = [1, 1]} : vector<16x20xf32> to vector<16x1xf32>
    %243 = vector.extract_strided_slice %0 {offsets = [0, 0, 0], sizes = [1, 16, 128], strides = [1, 1, 1]} : vector<4x16x128xf32> to vector<1x16x128xf32>
    %244 = vector.shape_cast %243 : vector<1x16x128xf32> to vector<16x128xf32>
    %245 = vector.broadcast %242 : vector<16x1xf32> to vector<16x128xf32>
    %246 = arith.mulf %245, %244 : vector<16x128xf32>
    %247 = vector.broadcast %241 : vector<16x1xf32> to vector<16x128xf32>
    %248 = arith.addf %247, %246 : vector<16x128xf32>
    %249 = vector.extract_strided_slice %182 {offsets = [0, 9], sizes = [16, 1], strides = [1, 1]} : vector<16x20xf32> to vector<16x1xf32>
    %250 = vector.extract_strided_slice %0 {offsets = [1, 0, 0], sizes = [1, 16, 128], strides = [1, 1, 1]} : vector<4x16x128xf32> to vector<1x16x128xf32>
    %251 = vector.shape_cast %250 : vector<1x16x128xf32> to vector<16x128xf32>
    %252 = vector.broadcast %249 : vector<16x1xf32> to vector<16x128xf32>
    %253 = arith.mulf %252, %251 : vector<16x128xf32>
    %254 = arith.addf %248, %253 : vector<16x128xf32>
    %255 = vector.extract_strided_slice %182 {offsets = [0, 10], sizes = [16, 1], strides = [1, 1]} : vector<16x20xf32> to vector<16x1xf32>
    %256 = vector.extract_strided_slice %0 {offsets = [2, 0, 0], sizes = [1, 16, 128], strides = [1, 1, 1]} : vector<4x16x128xf32> to vector<1x16x128xf32>
    %257 = vector.shape_cast %256 : vector<1x16x128xf32> to vector<16x128xf32>
    %258 = vector.broadcast %255 : vector<16x1xf32> to vector<16x128xf32>
    %259 = arith.mulf %258, %257 : vector<16x128xf32>
    %260 = arith.addf %254, %259 : vector<16x128xf32>
    %261 = vector.extract_strided_slice %182 {offsets = [0, 11], sizes = [16, 1], strides = [1, 1]} : vector<16x20xf32> to vector<16x1xf32>
    %262 = vector.extract_strided_slice %0 {offsets = [3, 0, 0], sizes = [1, 16, 128], strides = [1, 1, 1]} : vector<4x16x128xf32> to vector<1x16x128xf32>
    %263 = vector.shape_cast %262 : vector<1x16x128xf32> to vector<16x128xf32>
    %264 = vector.broadcast %261 : vector<16x1xf32> to vector<16x128xf32>
    %265 = arith.mulf %264, %263 : vector<16x128xf32>
    %266 = arith.addf %260, %265 : vector<16x128xf32>
    %c2 = arith.constant 2 : index
    %c0_44 = arith.constant 0 : index
    %c0_45 = arith.constant 0 : index
    %267 = vector.load %arg4[%c2, %c0_44, %c0_45] : memref<4x16x128xf32, #tpu.memory_space<vmem>>, vector<1x16x128xf32>
    %268 = vector.shape_cast %267 : vector<1x16x128xf32> to vector<16x128xf32>
    %269 = vector.shape_cast %266 : vector<16x128xf32> to vector<1x16x128xf32>
    tpu.vector_store %arg4[%c2, %c0_44, %c0_45], %269 {strides = array<i32>} : memref<4x16x128xf32, #tpu.memory_space<vmem>>, vector<1x16x128xf32>,
    %270 = vector.extract_strided_slice %182 {offsets = [0, 19], sizes = [16, 1], strides = [1, 1]} : vector<16x20xf32> to vector<16x1xf32>
    %271 = vector.extract_strided_slice %182 {offsets = [0, 12], sizes = [16, 1], strides = [1, 1]} : vector<16x20xf32> to vector<16x1xf32>
    %272 = vector.extract_strided_slice %0 {offsets = [0, 0, 0], sizes = [1, 16, 128], strides = [1, 1, 1]} : vector<4x16x128xf32> to vector<1x16x128xf32>
    %273 = vector.shape_cast %272 : vector<1x16x128xf32> to vector<16x128xf32>
    %274 = vector.broadcast %271 : vector<16x1xf32> to vector<16x128xf32>
    %275 = arith.mulf %274, %273 : vector<16x128xf32>
    %276 = vector.broadcast %270 : vector<16x1xf32> to vector<16x128xf32>
    %277 = arith.addf %276, %275 : vector<16x128xf32>
    %278 = vector.extract_strided_slice %182 {offsets = [0, 13], sizes = [16, 1], strides = [1, 1]} : vector<16x20xf32> to vector<16x1xf32>
    %279 = vector.extract_strided_slice %0 {offsets = [1, 0, 0], sizes = [1, 16, 128], strides = [1, 1, 1]} : vector<4x16x128xf32> to vector<1x16x128xf32>
    %280 = vector.shape_cast %279 : vector<1x16x128xf32> to vector<16x128xf32>
    %281 = vector.broadcast %278 : vector<16x1xf32> to vector<16x128xf32>
    %282 = arith.mulf %281, %280 : vector<16x128xf32>
    %283 = arith.addf %277, %282 : vector<16x128xf32>
    %284 = vector.extract_strided_slice %182 {offsets = [0, 14], sizes = [16, 1], strides = [1, 1]} : vector<16x20xf32> to vector<16x1xf32>
    %285 = vector.extract_strided_slice %0 {offsets = [2, 0, 0], sizes = [1, 16, 128], strides = [1, 1, 1]} : vector<4x16x128xf32> to vector<1x16x128xf32>
    %286 = vector.shape_cast %285 : vector<1x16x128xf32> to vector<16x128xf32>
    %287 = vector.broadcast %284 : vector<16x1xf32> to vector<16x128xf32>
    %288 = arith.mulf %287, %286 : vector<16x128xf32>
    %289 = arith.addf %283, %288 : vector<16x128xf32>
    %290 = vector.extract_strided_slice %182 {offsets = [0, 15], sizes = [16, 1], strides = [1, 1]} : vector<16x20xf32> to vector<16x1xf32>
    %291 = vector.extract_strided_slice %0 {offsets = [3, 0, 0], sizes = [1, 16, 128], strides = [1, 1, 1]} : vector<4x16x128xf32> to vector<1x16x128xf32>
    %292 = vector.shape_cast %291 : vector<1x16x128xf32> to vector<16x128xf32>
    %293 = vector.broadcast %290 : vector<16x1xf32> to vector<16x128xf32>
    %294 = arith.mulf %293, %292 : vector<16x128xf32>
    %295 = arith.addf %289, %294 : vector<16x128xf32>
    %c3 = arith.constant 3 : index
    %c0_46 = arith.constant 0 : index
    %c0_47 = arith.constant 0 : index
    %296 = vector.load %arg4[%c3, %c0_46, %c0_47] : memref<4x16x128xf32, #tpu.memory_space<vmem>>, vector<1x16x128xf32>
    %297 = vector.shape_cast %296 : vector<1x16x128xf32> to vector<16x128xf32>
    %298 = vector.shape_cast %295 : vector<16x128xf32> to vector<1x16x128xf32>
    tpu.vector_store %arg4[%c3, %c0_46, %c0_47], %298 {strides = array<i32>} : memref<4x16x128xf32, #tpu.memory_space<vmem>>, vector<1x16x128xf32>,
    return
  }
  func.func @transform_0(%arg0: i32) -> (i32, i32, i32) {
    %c0_i32 = arith.constant 0 : i32
    %c0_i32_0 = arith.constant 0 : i32
    %c0_i32_1 = arith.constant 0 : i32
    return %c0_i32, %arg0, %c0_i32_0 : i32, i32, i32
  }
  func.func @transform_1(%arg0: i32) -> (i32, i32) {
    %c0_i32 = arith.constant 0 : i32
    %c0_i32_0 = arith.constant 0 : i32
    %c0_i32_1 = arith.constant 0 : i32
    return %c0_i32, %c0_i32_0 : i32, i32
  }
  func.func @transform_2(%arg0: i32) -> (i32, i32) {
    %c0_i32 = arith.constant 0 : i32
    %c0_i32_0 = arith.constant 0 : i32
    %c0_i32_1 = arith.constant 0 : i32
    return %c0_i32, %c0_i32_0 : i32, i32
  }
  func.func @transform_3(%arg0: i32) -> (i32, i32, i32) {
    %c0_i32 = arith.constant 0 : i32
    %c0_i32_0 = arith.constant 0 : i32
    %c0_i32_1 = arith.constant 0 : i32
    return %c0_i32, %arg0, %c0_i32_0 : i32, i32, i32
  }
}

</mosaic_0001>

<llo_original>
// kernel: nonequi_channels_attention.1
$region0: #{nonequi_channels_attention.1}
  #allocation0 [shape = 'u32[]', space=smem, size = 0x4, offset = 0x4, fixed_abs, tag = 'smem constant byte address 0x4 - core index']
  #allocation1 [shape = 'u32[144,128]{1,0:T(1,128)}', space=vmem, size = 0x12000, scoped, tag = 'internal scratch']
  #allocation5 [shape = 's32[]', space=sflag, size = 0x4, offset = 0, fixed_abs, tag = 'sflag constant byte address 0x0 - dummy sync flag']
  %s0 = inlined_call_operand.vmem [shape: f32[4,32,128], index: 0, kind: input, shape index: {}]
  %s1 = inlined_call_operand.vmem [shape: f32[15,64], index: 1, kind: input, shape index: {}]
  %s2 = inlined_call_operand.vmem [shape: f32[9,20], index: 2, kind: input, shape index: {}]
  %s3 = inlined_call_operand.hbm [shape: f32[4,32,128], index: 3, kind: output, shape index: {}]
  %s4 = sld [smem:[#allocation0]]
  $region83: #{nonequi_channels_attention.1} parent=0
    _
  %s6 = ssub.s32 1, %s4
  %s7 = scalar_select 0, %s6, %s4
  $region1: #{nonequi_channels_attention.1} parent=0
    #allocation2 [shape = 'u8[65536]{0}', space=vmem, size = 0x10000, scoped, tag = 'input window, operand 0']
    #allocation3 [shape = 'u8[65536]{0}', space=vmem, size = 0x10000, scoped, tag = 'output window, operand 0']
    #allocation4 [shape = 's32[2]{0}', space=sflag, size = 0x8, scoped, tag = 'scoped memory for nonequi_channels_attention.1']
    %8 = vsyncpa [#allocation4], 0
    %s9 = scalar_lea.sflag [#allocation4], 1
    %10 = vsyncpa %s9, 0
    loop: start=0, step=1, limit=4
    $region2: #{nonequi_channels_attention.1} parent=1 // loop_pre_header
      _
    $region3: #{nonequi_channels_attention.1} parent=1 // loop_header
      %s12 = sphi 0, %s16
      %p13 = scmp.ge.s32.totalorder %s12, 4
      %s22 = sphi 0, %s24
      %s25 = sphi 0, %s22
      %s26 = sphi 0, %s25
      %s42 = sphi 0, %s26
      %s46 = sphi 0, %s46
      %s48 = sphi 0, %s46
      %s49 = sphi 0, %s48
      %s63 = sphi 0, %s49
      %s67 = sphi 0, %s67
      %s69 = sphi 0, %s67
      %s70 = sphi 0, %s69
      %s84 = sphi 0, %s70
      %s90 = sphi 0, %s92
      %s93 = sphi 0, %s90
      %s94 = sphi 0, %s93
      %s110 = sphi 0, %s94
    $region4: #{nonequi_channels_attention.1} parent=1 // loop_header_branch
      %15 = sbr.rel (%p13) target = $region8
    $region5: #{nonequi_channels_attention.1} parent=1 // loop_body
      %s17 = ssub.s32 %s12, 1
      %s18 = ssub.s32 %s12, 2
      %s19 = sadd.s32 %s12, 1
      %s20 = ssub.s32 %s12, %s19
      %p21 = scmp.eq.s32.totalorder %s20, 0
      %s23 = sadd.s32 %s22, 1
      %s24 = scalar_select %p21, %s22, %s23
      %p27 = pneg %p21
      %p28 = scmp.eq.s32.totalorder %s12, 1
      %p29 = por %p27, %p28
      %p30 = scmp.ne.s32.totalorder %s22, %s25
      %p31 = scmp.eq.s32.totalorder %s12, 0
      %p32 = por %p30, %p31
      %p33 = scmp.ne.s32.totalorder %s22, %s25
      %p34 = scmp.eq.s32.totalorder %s17, 1
      %p35 = por %p33, %p34
      %p36 = scmp.ne.s32.totalorder %s25, %s26
      %p37 = scmp.eq.s32.totalorder %s17, 0
      %p38 = por %p36, %p37
      %p39 = scmp.ne.s32.totalorder %s25, %s26
      %p40 = scmp.eq.s32.totalorder %s18, 1
      %p41 = por %p39, %p40
      %p43 = scmp.ne.s32.totalorder %s26, %s42
      %p44 = scmp.eq.s32.totalorder %s18, 0
      %p45 = por %p43, %p44
      %s47 = sadd.s32 %s46, 1
      %p50 = scmp.eq.s32.totalorder %s12, 1
      %p51 = scmp.ne.s32.totalorder %s46, %s48
      %p52 = scmp.eq.s32.totalorder %s12, 0
      %p53 = por %p51, %p52
      %p54 = scmp.ne.s32.totalorder %s46, %s48
      %p55 = scmp.eq.s32.totalorder %s17, 1
      %p56 = por %p54, %p55
      %p57 = scmp.ne.s32.totalorder %s48, %s49
      %p58 = scmp.eq.s32.totalorder %s17, 0
      %p59 = por %p57, %p58
      %p60 = scmp.ne.s32.totalorder %s48, %s49
      %p61 = scmp.eq.s32.totalorder %s18, 1
      %p62 = por %p60, %p61
      %p64 = scmp.ne.s32.totalorder %s49, %s63
      %p65 = scmp.eq.s32.totalorder %s18, 0
      %p66 = por %p64, %p65
      %s68 = sadd.s32 %s67, 1
      %p71 = scmp.eq.s32.totalorder %s12, 1
      %p72 = scmp.ne.s32.totalorder %s67, %s69
      %p73 = scmp.eq.s32.totalorder %s12, 0
      %p74 = por %p72, %p73
      %p75 = scmp.ne.s32.totalorder %s67, %s69
      %p76 = scmp.eq.s32.totalorder %s17, 1
      %p77 = por %p75, %p76
      %p78 = scmp.ne.s32.totalorder %s69, %s70
      %p79 = scmp.eq.s32.totalorder %s17, 0
      %p80 = por %p78, %p79
      %p81 = scmp.ne.s32.totalorder %s69, %s70
      %p82 = scmp.eq.s32.totalorder %s18, 1
      %p83 = por %p81, %p82
      %p85 = scmp.ne.s32.totalorder %s70, %s84
      %p86 = scmp.eq.s32.totalorder %s18, 0
      %p87 = por %p85, %p86
      %s88 = ssub.s32 %s12, %s19
      %p89 = scmp.eq.s32.totalorder %s88, 0
      %s91 = sadd.s32 %s90, 1
      %s92 = scalar_select %p89, %s90, %s91
      %p95 = pneg %p89
      %p96 = scmp.eq.s32.totalorder %s12, 1
      %p97 = por %p95, %p96
      %p98 = scmp.ne.s32.totalorder %s90, %s93
      %p99 = scmp.eq.s32.totalorder %s12, 0
      %p100 = por %p98, %p99
      %p101 = scmp.ne.s32.totalorder %s90, %s93
      %p102 = scmp.eq.s32.totalorder %s17, 1
      %p103 = por %p101, %p102
      %p104 = scmp.ne.s32.totalorder %s93, %s94
      %p105 = scmp.eq.s32.totalorder %s17, 0
      %p106 = por %p104, %p105
      %p107 = scmp.ne.s32.totalorder %s93, %s94
      %p108 = scmp.eq.s32.totalorder %s18, 1
      %p109 = por %p107, %p108
      %p111 = scmp.ne.s32.totalorder %s94, %s110
      %p112 = scmp.eq.s32.totalorder %s18, 0
      %p113 = por %p111, %p112
      %p114 = scmp.le.s32.totalorder 1, %s12
      %p115 = scmp.lt.s32.totalorder %s12, 3
      %p116 = pnand %p114, %p115
      %p117 = pneg %p116
      // Predicated region
      $region9: #{nonequi_channels_attention.1} parent=5 // pred_check
        _
      $region10: #{nonequi_channels_attention.1} parent=5 // pred_check_branch
        %119 = sbr.rel (%p116) target = $region12
      $region11: #{nonequi_channels_attention.1} parent=5 // pred_region
        %s120 = ssub.s32 %s12, 1
        // Predicated region
        $region13: #{nonequi_channels_attention.1} parent=11 // pred_check
          %p121 = pneg %p59
        $region14: #{nonequi_channels_attention.1} parent=11 // pred_check_branch
          %123 = sbr.rel (%p121) target = $region16
        $region15: #{nonequi_channels_attention.1} parent=11 // pred_region
          _
        $region16: #{nonequi_channels_attention.1} parent=11 // pred_fallthru
          _
        // Predicated region
        $region17: #{nonequi_channels_attention.1} parent=11 // pred_check
          %p124 = pneg %p80
        $region18: #{nonequi_channels_attention.1} parent=11 // pred_check_branch
          %126 = sbr.rel (%p124) target = $region20
        $region19: #{nonequi_channels_attention.1} parent=11 // pred_region
          _
        $region20: #{nonequi_channels_attention.1} parent=11 // pred_fallthru
          _
      $region12: #{nonequi_channels_attention.1} parent=5 // pred_fallthru
        _
      %p127 = scmp.lt.s32.totalorder %s12, 2
      // Predicated region
      $region21: #{nonequi_channels_attention.1} parent=5 // pred_check
        %p128 = pneg %p127
      $region22: #{nonequi_channels_attention.1} parent=5 // pred_check_branch
        %130 = sbr.rel (%p128) target = $region24
      $region23: #{nonequi_channels_attention.1} parent=5 // pred_region
        // Predicated region
        $region25: #{nonequi_channels_attention.1} parent=23 // pred_check
          %p131 = pneg %p32
        $region26: #{nonequi_channels_attention.1} parent=23 // pred_check_branch
          %133 = sbr.rel (%p131) target = $region28
        $region27: #{nonequi_channels_attention.1} parent=23 // pred_region
          %s134 = sand.u32 %s22, 1
          %s135 = sand.u32 %s22, 1
          %s136 = smul.addr %s135, 64
          %s137 = scalar_lea.vmem [#allocation2], %s136
          %s138 = smul.u32 2, %s12
          %s139 = smul.addr %s138, 8
          %s140 = scalar_lea.vmem %s0, %s139
          // Predicated region
          $region29: #{nonequi_channels_attention.1} parent=27 // pred_check
            _
          $region30: #{nonequi_channels_attention.1} parent=27 // pred_check_branch
            %142 = sbr.rel (0) target = $region32
          $region31: #{nonequi_channels_attention.1} parent=27 // pred_region
            // Predicated region
            $region33: #{nonequi_channels_attention.1} parent=31 // pred_check
              _
            $region34: #{nonequi_channels_attention.1} parent=31 // pred_check_branch
              %144 = sbr.rel (0) target = $region36
            $region35: #{nonequi_channels_attention.1} parent=31 // pred_region
              // Predicated region
              $region48: #{nonequi_channels_attention.1} parent=35 // pred_check
                _
              $region49: #{nonequi_channels_attention.1} parent=35 // pred_check_branch
                %174 = sbr.rel (0) target = $region51
              $region50: #{nonequi_channels_attention.1} parent=35 // pred_region
                loop: start=0, step=1, limit=1
                $region52: #{nonequi_channels_attention.1} parent=50 // loop_pre_header
                  _
                $region53: #{nonequi_channels_attention.1} parent=50 // loop_header
                  %s176 = sphi 0, %s180
                  %p177 = scmp.ge.s32.totalorder %s176, 1
                  %s181 = sphi %s140, %s140
                  %s182 = sphi %s137, %s137
                $region54: #{nonequi_channels_attention.1} parent=50 // loop_header_branch
                  %179 = sbr.rel (%p177) target = $region58
                $region55: #{nonequi_channels_attention.1} parent=50 // loop_body
                  %v183 = vld [vmem:[%s181] sm:$0xff]
                  %184 = vst [vmem:[%s182] sm:$0xff] %v183
                  %v185 = vld [vmem:[%s181 + $0x8] sm:$0xff]
                  %186 = vst [vmem:[%s182 + $0x8] sm:$0xff] %v185
                  %v187 = vld [vmem:[%s181 + $0x20] sm:$0xff]
                  %188 = vst [vmem:[%s182 + $0x10] sm:$0xff] %v187
                  %v189 = vld [vmem:[%s181 + $0x28] sm:$0xff]
                  %190 = vst [vmem:[%s182 + $0x18] sm:$0xff] %v189
                  %v191 = vld [vmem:[%s181 + $0x40] sm:$0xff]
                  %192 = vst [vmem:[%s182 + $0x20] sm:$0xff] %v191
                  %v193 = vld [vmem:[%s181 + $0x48] sm:$0xff]
                  %194 = vst [vmem:[%s182 + $0x28] sm:$0xff] %v193
                  %v195 = vld [vmem:[%s181 + $0x60] sm:$0xff]
                  %196 = vst [vmem:[%s182 + $0x30] sm:$0xff] %v195
                  %v197 = vld [vmem:[%s181 + $0x68] sm:$0xff]
                  %198 = vst [vmem:[%s182 + $0x38] sm:$0xff] %v197
                $region56: #{nonequi_channels_attention.1} parent=50 // loop_footer
                  %s180 = sadd.s32 1, %s176
                $region57: #{nonequi_channels_attention.1} parent=50 // loop_footer_branch
                  %175 = sbr.rel target = $region53
                $region58: #{nonequi_channels_attention.1} parent=50 // loop_exit
                  _
              $region51: #{nonequi_channels_attention.1} parent=35 // pred_fallthru
                _
              // Predicated region
              $region59: #{nonequi_channels_attention.1} parent=35 // pred_check
                _
              $region60: #{nonequi_channels_attention.1} parent=35 // pred_check_branch
                %200 = sbr.rel target = $region62
              $region61: #{nonequi_channels_attention.1} parent=35 // pred_region
                _
              $region62: #{nonequi_channels_attention.1} parent=35 // pred_fallthru
                _
            $region36: #{nonequi_channels_attention.1} parent=31 // pred_fallthru
              _
            // Predicated region
            $region37: #{nonequi_channels_attention.1} parent=31 // pred_check
              _
            $region38: #{nonequi_channels_attention.1} parent=31 // pred_check_branch
              %146 = sbr.rel target = $region40
            $region39: #{nonequi_channels_attention.1} parent=31 // pred_region
              %s148 = ssub.s32 256, 1
              loop: start=0, step=1, limit=1
              $region41: #{nonequi_channels_attention.1} parent=39 // loop_pre_header
                _
              $region42: #{nonequi_channels_attention.1} parent=39 // loop_header
                %s150 = sphi 0, %s154
                %p151 = scmp.ge.s32.totalorder %s150, 1
                %s155 = sphi %s140, %s140
                %s156 = sphi %s137, %s137
              $region43: #{nonequi_channels_attention.1} parent=39 // loop_header_branch
                %153 = sbr.rel (%p151) target = $region47
              $region44: #{nonequi_channels_attention.1} parent=39 // loop_body
                %v157 = vld [vmem:[%s155] sm:%s148]
                %158 = vst [vmem:[%s156] sm:%s148] %v157
                %v159 = vld [vmem:[%s155 + $0x8] sm:%s148]
                %160 = vst [vmem:[%s156 + $0x8] sm:%s148] %v159
                %v161 = vld [vmem:[%s155 + $0x20] sm:%s148]
                %162 = vst [vmem:[%s156 + $0x10] sm:%s148] %v161
                %v163 = vld [vmem:[%s155 + $0x28] sm:%s148]
                %164 = vst [vmem:[%s156 + $0x18] sm:%s148] %v163
                %v165 = vld [vmem:[%s155 + $0x40] sm:%s148]
                %166 = vst [vmem:[%s156 + $0x20] sm:%s148] %v165
                %v167 = vld [vmem:[%s155 + $0x48] sm:%s148]
                %168 = vst [vmem:[%s156 + $0x28] sm:%s148] %v167
                %v169 = vld [vmem:[%s155 + $0x60] sm:%s148]
                %170 = vst [vmem:[%s156 + $0x30] sm:%s148] %v169
                %v171 = vld [vmem:[%s155 + $0x68] sm:%s148]
                %172 = vst [vmem:[%s156 + $0x38] sm:%s148] %v171
              $region45: #{nonequi_channels_attention.1} parent=39 // loop_footer
                %s154 = sadd.s32 1, %s150
              $region46: #{nonequi_channels_attention.1} parent=39 // loop_footer_branch
                %149 = sbr.rel target = $region42
              $region47: #{nonequi_channels_attention.1} parent=39 // loop_exit
                _
            $region40: #{nonequi_channels_attention.1} parent=31 // pred_fallthru
              _
          $region32: #{nonequi_channels_attention.1} parent=27 // pred_fallthru
            _
          %201 = vnop
        $region28: #{nonequi_channels_attention.1} parent=23 // pred_fallthru
          _
      $region24: #{nonequi_channels_attention.1} parent=5 // pred_fallthru
        _
      %p202 = scmp.le.s32.totalorder 1, %s12
      %p203 = scmp.lt.s32.totalorder %s12, 3
      %p204 = pnand %p202, %p203
      %p205 = pneg %p204
      // Predicated region
      $region63: #{nonequi_channels_attention.1} parent=5 // pred_check
        _
      $region64: #{nonequi_channels_attention.1} parent=5 // pred_check_branch
        %207 = sbr.rel (%p204) target = $region66
      $region65: #{nonequi_channels_attention.1} parent=5 // pred_region
        %s208 = ssub.s32 %s12, 1
        %s209 = sand.u32 %s25, 1
        %s210 = sand.u32 %s25, 1
        %s211 = smul.addr %s210, 64
        %s212 = scalar_lea.vmem [#allocation2], %s211
        // Predicated region
        $region67: #{nonequi_channels_attention.1} parent=65 // pred_check
          %p213 = pneg %p38
        $region68: #{nonequi_channels_attention.1} parent=65 // pred_check_branch
          %215 = sbr.rel (%p213) target = $region70
        $region69: #{nonequi_channels_attention.1} parent=65 // pred_region
          _
        $region70: #{nonequi_channels_attention.1} parent=65 // pred_fallthru
          _
        %s216 = sand.u32 %s25, 1
        %s217 = sand.u32 %s25, 1
        %s218 = smul.addr %s217, 64
        %s219 = scalar_lea.vmem [#allocation2], %s218
        %p220 = pneg %p38
        %p221 = pneg %p35
        %p222 = pneg %p59
        %p223 = pneg %p56
        %p224 = pneg %p80
        %p225 = pneg %p77
        %p226 = pneg %p106
        %p227 = pneg %p103
        %s228 = sand.u32 %s93, 1
        %s229 = scalar_lea.sflag [#allocation4], %s228
        %s230 = sand.u32 %s93, 1
        %s231 = smul.addr %s230, 64
        %s232 = scalar_lea.vmem [#allocation3], %s231
        %s233 = smul.u32 2, %s17
        %s234 = smul.u32 2, %s17
        %v235 = vld [vmem:[%s212] sm:$0xff]
        %v236 = vld [vmem:[%s212 + $0x8] sm:$0xff]
        %v237 = vld [vmem:[%s212 + $0x10] sm:$0xff]
        %v238 = vld [vmem:[%s212 + $0x18] sm:$0xff]
        %v239 = vld [vmem:[%s212 + $0x20] sm:$0xff]
        %v240 = vld [vmem:[%s212 + $0x28] sm:$0xff]
        %v241 = vld [vmem:[%s212 + $0x30] sm:$0xff]
        %v242 = vld [vmem:[%s212 + $0x38] sm:$0xff]
        %v243 = vmul.f32 %v235, %v235
        %v244 = vmul.f32 %v236, %v236
        %245 = vadd.xlane.f32.xlu0 %v243
        %v246 = vpop.xlane.xlu0 %245
        %247 = vadd.xlane.f32.xlu0 %v244
        %v248 = vpop.xlane.xlu0 %247
        %v249 = vmul.f32 %v235, %v237
        %v250 = vmul.f32 %v236, %v238
        %251 = vadd.xlane.f32.xlu0 %v249
        %v252 = vpop.xlane.xlu0 %251
        %253 = vadd.xlane.f32.xlu0 %v250
        %v254 = vpop.xlane.xlu0 %253
        %v255 = vmul.f32 %v235, %v239
        %v256 = vmul.f32 %v236, %v240
        %257 = vadd.xlane.f32.xlu0 %v255
        %v258 = vpop.xlane.xlu0 %257
        %259 = vadd.xlane.f32.xlu0 %v256
        %v260 = vpop.xlane.xlu0 %259
        %v261 = vmul.f32 %v235, %v241
        %v262 = vmul.f32 %v236, %v242
        %263 = vadd.xlane.f32.xlu0 %v261
        %v264 = vpop.xlane.xlu0 %263
        %265 = vadd.xlane.f32.xlu0 %v262
        %v266 = vpop.xlane.xlu0 %265
        %v267 = vmul.f32 %v237, %v237
        %v268 = vmul.f32 %v238, %v238
        %269 = vadd.xlane.f32.xlu0 %v267
        %v270 = vpop.xlane.xlu0 %269
        %271 = vadd.xlane.f32.xlu0 %v268
        %v272 = vpop.xlane.xlu0 %271
        %v273 = vmul.f32 %v237, %v239
        %v274 = vmul.f32 %v238, %v240
        %275 = vadd.xlane.f32.xlu0 %v273
        %v276 = vpop.xlane.xlu0 %275
        %277 = vadd.xlane.f32.xlu0 %v274
        %v278 = vpop.xlane.xlu0 %277
        %v279 = vmul.f32 %v237, %v241
        %v280 = vmul.f32 %v238, %v242
        %281 = vadd.xlane.f32.xlu0 %v279
        %v282 = vpop.xlane.xlu0 %281
        %283 = vadd.xlane.f32.xlu0 %v280
        %v284 = vpop.xlane.xlu0 %283
        %v285 = vmul.f32 %v239, %v239
        %v286 = vmul.f32 %v240, %v240
        %287 = vadd.xlane.f32.xlu0 %v285
        %v288 = vpop.xlane.xlu0 %287
        %289 = vadd.xlane.f32.xlu0 %v286
        %v290 = vpop.xlane.xlu0 %289
        %v291 = vmul.f32 %v239, %v241
        %v292 = vmul.f32 %v240, %v242
        %293 = vadd.xlane.f32.xlu0 %v291
        %v294 = vpop.xlane.xlu0 %293
        %295 = vadd.xlane.f32.xlu0 %v292
        %v296 = vpop.xlane.xlu0 %295
        %v297 = vmul.f32 %v241, %v241
        %v298 = vmul.f32 %v242, %v242
        %299 = vadd.xlane.f32.xlu0 %v297
        %v300 = vpop.xlane.xlu0 %299
        %301 = vadd.xlane.f32.xlu0 %v298
        %v302 = vpop.xlane.xlu0 %301
        %303 = vadd.xlane.f32.xlu0 %v235
        %v304 = vpop.xlane.xlu0 %303
        %305 = vadd.xlane.f32.xlu0 %v236
        %v306 = vpop.xlane.xlu0 %305
        %307 = vadd.xlane.f32.xlu0 %v237
        %v308 = vpop.xlane.xlu0 %307
        %309 = vadd.xlane.f32.xlu0 %v238
        %v310 = vpop.xlane.xlu0 %309
        %311 = vadd.xlane.f32.xlu0 %v239
        %v312 = vpop.xlane.xlu0 %311
        %313 = vadd.xlane.f32.xlu0 %v240
        %v314 = vpop.xlane.xlu0 %313
        %315 = vadd.xlane.f32.xlu0 %v241
        %v316 = vpop.xlane.xlu0 %315
        %317 = vadd.xlane.f32.xlu0 %v242
        %v318 = vpop.xlane.xlu0 %317
        %vm319 = vcmask 7168
        %v320 = vsel %vm319, %v246, %v252
        %v321 = vsel %vm319, %v248, %v254
        %vm322 = vcmask 15360
        %v323 = vsel %vm322, %v320, %v258
        %v324 = vsel %vm322, %v321, %v260
        %vm325 = vcmask 23552
        %v326 = vsel %vm325, %v323, %v264
        %v327 = vsel %vm325, %v324, %v266
        %vm328 = vcmask 31744
        %v329 = vsel %vm328, %v326, %v270
        %v330 = vsel %vm328, %v327, %v272
        %vm331 = vcmask 39936
        %v332 = vsel %vm331, %v329, %v276
        %v333 = vsel %vm331, %v330, %v278
        %vm334 = vcmask 48128
        %v335 = vsel %vm334, %v332, %v282
        %v336 = vsel %vm334, %v333, %v284
        %vm337 = vcmask 56320
        %v338 = vsel %vm337, %v335, %v288
        %v339 = vsel %vm337, %v336, %v290
        %vm340 = vcmask 64512
        %v341 = vsel %vm340, %v338, %v294
        %v342 = vsel %vm340, %v339, %v296
        %vm343 = vcmask 72704
        %v344 = vsel %vm343, %v341, %v300
        %v345 = vsel %vm343, %v342, %v302
        %vm346 = vcmask 80896
        %v347 = vsel %vm346, %v344, %v304
        %v348 = vsel %vm346, %v345, %v306
        %vm349 = vcmask 89088
        %v350 = vsel %vm349, %v347, %v308
        %v351 = vsel %vm349, %v348, %v310
        %vm352 = vcmask 97280
        %v353 = vsel %vm352, %v350, %v312
        %v354 = vsel %vm352, %v351, %v314
        %vm355 = vcmask 105472
        %v356 = vsel %vm355, %v353, %v316
        %v357 = vsel %vm355, %v354, %v318
        %vm358 = vcmask 113664
        %v359 = vsel %vm358, %v356, 1.0
        %v360 = vsel %vm358, %v357, 1.0
        %v361 = vld [vmem:[%s1] sm:$0xff]
        %v362 = vld [vmem:[%s1 + $0x8] sm:$0x7f]
        %vm363 = vcmask 121856
        %v365 = vsel %vm363, %v359, 0
        %v368 = vsel %vm363, %v360, 0
        %vm370 = vcmask 1046528
        %v372 = vsel %vm370, %v362, 0
        %374 = vmatprep.subr.mxu0 0.0
        %375 = vmatpush1.msra.mxu0 0.0
        %376 = vmatprep.subr.mxu0 0.0
        %377 = vmatpush1.msra.mxu0 0.0
        %378 = vmatprep.subr.mxu0 0.0
        %379 = vmatpush1.msra.mxu0 0.0
        %380 = vmatprep.subr.mxu0 0.0
        %381 = vmatpush1.msra.mxu0 0.0
        %382 = vmatprep.subr.mxu0 0.0
        %383 = vmatpush1.msra.mxu0 0.0
        %384 = vmatprep.subr.mxu0 0.0
        %385 = vmatpush1.msra.mxu0 0.0
        %386 = vmatprep.subr.mxu0 0.0
        %387 = vmatpush1.msra.mxu0 0.0
        %388 = vmatprep.subr.mxu0 0.0
        %389 = vmatpush1.msra.mxu0 0.0
        %390 = vmatprep.subr.mxu0 0.0
        %391 = vmatpush1.msra.mxu0 0.0
        %392 = vmatprep.subr.mxu0 0.0
        %393 = vmatpush1.msra.mxu0 0.0
        %394 = vmatprep.subr.mxu0 0.0
        %395 = vmatpush1.msra.mxu0 0.0
        %396 = vmatprep.subr.mxu0 0.0
        %397 = vmatpush1.msra.mxu0 0.0
        %398 = vmatprep.subr.mxu0 0.0
        %399 = vmatpush1.msra.mxu0 0.0
        %400 = vmatprep.subr.mxu0 0.0
        %401 = vmatpush1.msra.mxu0 0.0
        %402 = vmatprep.subr.mxu0 0.0
        %403 = vmatpush1.msra.mxu0 %v372
        %404 = vmatprep.subr.mxu0 0.0
        %405 = vmatpush1.msra.mxu0 %v361
        %406 = vmatprep.subr.mxu0 0.0
        %407 = vmatpush2.msra.mxu0 0.0
        %408 = vmatprep.subr.mxu0 0.0
        %409 = vmatpush2.msra.mxu0 0.0
        %410 = vmatprep.subr.mxu0 0.0
        %411 = vmatpush2.msra.mxu0 0.0
        %412 = vmatprep.subr.mxu0 0.0
        %413 = vmatpush2.msra.mxu0 0.0
        %414 = vmatprep.subr.mxu0 0.0
        %415 = vmatpush2.msra.mxu0 0.0
        %416 = vmatprep.subr.mxu0 0.0
        %417 = vmatpush2.msra.mxu0 0.0
        %418 = vmatprep.subr.mxu0 0.0
        %419 = vmatpush2.msra.mxu0 0.0
        %420 = vmatprep.subr.mxu0 0.0
        %421 = vmatpush2.msra.mxu0 0.0
        %422 = vmatprep.subr.mxu0 0.0
        %423 = vmatpush2.msra.mxu0 0.0
        %424 = vmatprep.subr.mxu0 0.0
        %425 = vmatpush2.msra.mxu0 0.0
        %426 = vmatprep.subr.mxu0 0.0
        %427 = vmatpush2.msra.mxu0 0.0
        %428 = vmatprep.subr.mxu0 0.0
        %429 = vmatpush2.msra.mxu0 0.0
        %430 = vmatprep.subr.mxu0 0.0
        %431 = vmatpush2.msra.mxu0 0.0
        %432 = vmatprep.subr.mxu0 0.0
        %433 = vmatpush2.msra.mxu0 0.0
        %434 = vmatprep.subr.mxu0 0.0
        %435 = vmatpush2.msra.mxu0 0.0
        %436 = vmatprep.subr.mxu0 0.0
        %437 = vmatpush2.msra.mxu0 0.0
        %438 = vmatprep.mubr.f32.mxu0 0.0
        %439 = vmatmul.mubr.f32.gmra.mxu0 %v365
        %v440 = vpop.f32.mrf.mxu0
        %v441 = vadd.f32 0.0, %v440
        %v442 = vpop.f32.mrf.mxu0
        %443 = vmatprep.mubr.f32.mxu0 0.0
        %444 = vmatmul.mubr.f32.gmra.mxu0 %v368
        %v445 = vpop.f32.mrf.mxu0
        %v446 = vadd.f32 0.0, %v445
        %v447 = vpop.f32.mrf.mxu0
        %448 = vdwg.mxu0
        %v449 = vsel %vm340, %v441, -inf
        %450 = vmax.xlane.f32.xlu0 %v449
        %v451 = vpop.xlane.xlu0 %450
        %v452 = vsel %vm340, %v446, -inf
        %453 = vmax.xlane.f32.xlu0 %v452
        %v454 = vpop.xlane.xlu0 %453
        %v455 = vsub.f32 %v441, %v451
        %v456 = vsub.f32 %v446, %v454
        %v457 = vmul.f32 %v455, 1.442695
        %v458 = vpow.pop %v457
        %v459 = vmul.f32 %v456, 1.442695
        %v460 = vpow.pop %v459
        %v461 = vsel %vm340, %v458, 0.0
        %462 = vadd.xlane.f32.xlu0 %v461
        %v463 = vpop.xlane.xlu0 %462
        %v464 = vsel %vm340, %v460, 0.0
        %465 = vadd.xlane.f32.xlu0 %v464
        %v466 = vpop.xlane.xlu0 %465
        %v467 = vrcp.pop %v463
        %v468 = vmul.f32 %v458, %v467
        %v469 = vrcp.pop %v466
        %v470 = vmul.f32 %v460, %v469
        %v471 = vadd.f32 %v468, 0.0
        %v472 = vadd.f32 %v470, 0.0
        %vm473 = vcmask 130112
        %v474 = vsel %vm473, %v441, -inf
        %475 = vmax.xlane.f32.xlu0 %v474
        %v476 = vpop.xlane.xlu0 %475
        %v477 = vsel %vm473, %v446, -inf
        %478 = vmax.xlane.f32.xlu0 %v477
        %v479 = vpop.xlane.xlu0 %478
        %v480 = vsub.f32 %v441, %v476
        %v481 = vsub.f32 %v446, %v479
        %v482 = vmul.f32 %v480, 1.442695
        %v483 = vpow.pop %v482
        %v484 = vmul.f32 %v481, 1.442695
        %v485 = vpow.pop %v484
        %488 = vrot.lane.b32.xlu0 %v483, 120
        %v489 = vpop.permute.xlu0 %488
        %490 = vrot.lane.b32.xlu0 %v485, 120
        %v491 = vpop.permute.xlu0 %490
        %v494 = vsel %vm340, %v489, 0.0
        %495 = vadd.xlane.f32.xlu0 %v494
        %v496 = vpop.xlane.xlu0 %495
        %v497 = vsel %vm340, %v491, 0.0
        %498 = vadd.xlane.f32.xlu0 %v497
        %v499 = vpop.xlane.xlu0 %498
        %v500 = vrcp.pop %v496
        %v501 = vmul.f32 %v483, %v500
        %v502 = vrcp.pop %v499
        %v503 = vmul.f32 %v485, %v502
        %506 = vrot.lane.b32.xlu0 %v501, 120
        %v507 = vpop.permute.xlu0 %506
        %508 = vrot.lane.b32.xlu0 %v503, 120
        %v509 = vpop.permute.xlu0 %508
        %v512 = vadd.f32 %v471, %v507
        %v513 = vadd.f32 %v472, %v509
        %vm514 = vcmask 195712
        %v515 = vsel %vm514, %v441, -inf
        %516 = vmax.xlane.f32.xlu0 %v515
        %v517 = vpop.xlane.xlu0 %516
        %v518 = vsel %vm514, %v446, -inf
        %519 = vmax.xlane.f32.xlu0 %v518
        %v520 = vpop.xlane.xlu0 %519
        %v521 = vsub.f32 %v441, %v517
        %v522 = vsub.f32 %v446, %v520
        %v523 = vmul.f32 %v521, 1.442695
        %v524 = vpow.pop %v523
        %v525 = vmul.f32 %v522, 1.442695
        %v526 = vpow.pop %v525
        %529 = vrot.lane.b32.xlu0 %v524, 112
        %v530 = vpop.permute.xlu0 %529
        %531 = vrot.lane.b32.xlu0 %v526, 112
        %v532 = vpop.permute.xlu0 %531
        %v535 = vsel %vm340, %v530, 0.0
        %536 = vadd.xlane.f32.xlu0 %v535
        %v537 = vpop.xlane.xlu0 %536
        %v538 = vsel %vm340, %v532, 0.0
        %539 = vadd.xlane.f32.xlu0 %v538
        %v540 = vpop.xlane.xlu0 %539
        %v541 = vrcp.pop %v537
        %v542 = vmul.f32 %v524, %v541
        %v543 = vrcp.pop %v540
        %v544 = vmul.f32 %v526, %v543
        %547 = vrot.lane.b32.xlu0 %v542, 112
        %v548 = vpop.permute.xlu0 %547
        %549 = vrot.lane.b32.xlu0 %v544, 112
        %v550 = vpop.permute.xlu0 %549
        %v553 = vadd.f32 %v512, %v548
        %v554 = vadd.f32 %v513, %v550
        %vm555 = vcmask 261312
        %v556 = vsel %vm555, %v441, -inf
        %557 = vmax.xlane.f32.xlu0 %v556
        %v558 = vpop.xlane.xlu0 %557
        %v559 = vsel %vm555, %v446, -inf
        %560 = vmax.xlane.f32.xlu0 %v559
        %v561 = vpop.xlane.xlu0 %560
        %v562 = vsub.f32 %v441, %v558
        %v563 = vsub.f32 %v446, %v561
        %v564 = vmul.f32 %v562, 1.442695
        %v565 = vpow.pop %v564
        %v566 = vmul.f32 %v563, 1.442695
        %v567 = vpow.pop %v566
        %570 = vrot.lane.b32.xlu0 %v565, 104
        %v571 = vpop.permute.xlu0 %570
        %572 = vrot.lane.b32.xlu0 %v567, 104
        %v573 = vpop.permute.xlu0 %572
        %v576 = vsel %vm340, %v571, 0.0
        %577 = vadd.xlane.f32.xlu0 %v576
        %v578 = vpop.xlane.xlu0 %577
        %v579 = vsel %vm340, %v573, 0.0
        %580 = vadd.xlane.f32.xlu0 %v579
        %v581 = vpop.xlane.xlu0 %580
        %v582 = vrcp.pop %v578
        %v583 = vmul.f32 %v565, %v582
        %v584 = vrcp.pop %v581
        %v585 = vmul.f32 %v567, %v584
        %588 = vrot.lane.b32.xlu0 %v583, 104
        %v589 = vpop.permute.xlu0 %588
        %590 = vrot.lane.b32.xlu0 %v585, 104
        %v591 = vpop.permute.xlu0 %590
        %v594 = vadd.f32 %v553, %v589
        %v595 = vadd.f32 %v554, %v591
        %vm596 = vcmask 326912
        %v597 = vsel %vm596, %v441, -inf
        %598 = vmax.xlane.f32.xlu0 %v597
        %v599 = vpop.xlane.xlu0 %598
        %v600 = vsel %vm596, %v446, -inf
        %601 = vmax.xlane.f32.xlu0 %v600
        %v602 = vpop.xlane.xlu0 %601
        %v603 = vsub.f32 %v441, %v599
        %v604 = vsub.f32 %v446, %v602
        %v605 = vmul.f32 %v603, 1.442695
        %v606 = vpow.pop %v605
        %v607 = vmul.f32 %v604, 1.442695
        %v608 = vpow.pop %v607
        %611 = vrot.lane.b32.xlu0 %v606, 96
        %v612 = vpop.permute.xlu0 %611
        %613 = vrot.lane.b32.xlu0 %v608, 96
        %v614 = vpop.permute.xlu0 %613
        %v617 = vsel %vm340, %v612, 0.0
        %618 = vadd.xlane.f32.xlu0 %v617
        %v619 = vpop.xlane.xlu0 %618
        %v620 = vsel %vm340, %v614, 0.0
        %621 = vadd.xlane.f32.xlu0 %v620
        %v622 = vpop.xlane.xlu0 %621
        %v623 = vrcp.pop %v619
        %v624 = vmul.f32 %v606, %v623
        %v625 = vrcp.pop %v622
        %v626 = vmul.f32 %v608, %v625
        %629 = vrot.lane.b32.xlu0 %v624, 96
        %v630 = vpop.permute.xlu0 %629
        %631 = vrot.lane.b32.xlu0 %v626, 96
        %v632 = vpop.permute.xlu0 %631
        %v635 = vadd.f32 %v594, %v630
        %v636 = vadd.f32 %v595, %v632
        %vm637 = vcmask 392512
        %v638 = vsel %vm637, %v441, -inf
        %639 = vmax.xlane.f32.xlu0 %v638
        %v640 = vpop.xlane.xlu0 %639
        %v641 = vsel %vm637, %v446, -inf
        %642 = vmax.xlane.f32.xlu0 %v641
        %v643 = vpop.xlane.xlu0 %642
        %v644 = vsub.f32 %v441, %v640
        %v645 = vsub.f32 %v446, %v643
        %v646 = vmul.f32 %v644, 1.442695
        %v647 = vpow.pop %v646
        %v648 = vmul.f32 %v645, 1.442695
        %v649 = vpow.pop %v648
        %652 = vrot.lane.b32.xlu0 %v647, 88
        %v653 = vpop.permute.xlu0 %652
        %654 = vrot.lane.b32.xlu0 %v649, 88
        %v655 = vpop.permute.xlu0 %654
        %v658 = vsel %vm340, %v653, 0.0
        %659 = vadd.xlane.f32.xlu0 %v658
        %v660 = vpop.xlane.xlu0 %659
        %v661 = vsel %vm340, %v655, 0.0
        %662 = vadd.xlane.f32.xlu0 %v661
        %v663 = vpop.xlane.xlu0 %662
        %v664 = vrcp.pop %v660
        %v665 = vmul.f32 %v647, %v664
        %v666 = vrcp.pop %v663
        %v667 = vmul.f32 %v649, %v666
        %670 = vrot.lane.b32.xlu0 %v665, 88
        %v671 = vpop.permute.xlu0 %670
        %672 = vrot.lane.b32.xlu0 %v667, 88
        %v673 = vpop.permute.xlu0 %672
        %v676 = vadd.f32 %v635, %v671
        %v677 = vadd.f32 %v636, %v673
        %vm678 = vcmask 458112
        %v679 = vsel %vm678, %v441, -inf
        %680 = vmax.xlane.f32.xlu0 %v679
        %v681 = vpop.xlane.xlu0 %680
        %v682 = vsel %vm678, %v446, -inf
        %683 = vmax.xlane.f32.xlu0 %v682
        %v684 = vpop.xlane.xlu0 %683
        %v685 = vsub.f32 %v441, %v681
        %v686 = vsub.f32 %v446, %v684
        %v687 = vmul.f32 %v685, 1.442695
        %v688 = vpow.pop %v687
        %v689 = vmul.f32 %v686, 1.442695
        %v690 = vpow.pop %v689
        %693 = vrot.lane.b32.xlu0 %v688, 80
        %v694 = vpop.permute.xlu0 %693
        %695 = vrot.lane.b32.xlu0 %v690, 80
        %v696 = vpop.permute.xlu0 %695
        %v699 = vsel %vm340, %v694, 0.0
        %700 = vadd.xlane.f32.xlu0 %v699
        %v701 = vpop.xlane.xlu0 %700
        %v702 = vsel %vm340, %v696, 0.0
        %703 = vadd.xlane.f32.xlu0 %v702
        %v704 = vpop.xlane.xlu0 %703
        %v705 = vrcp.pop %v701
        %v706 = vmul.f32 %v688, %v705
        %v707 = vrcp.pop %v704
        %v708 = vmul.f32 %v690, %v707
        %711 = vrot.lane.b32.xlu0 %v706, 80
        %v712 = vpop.permute.xlu0 %711
        %713 = vrot.lane.b32.xlu0 %v708, 80
        %v714 = vpop.permute.xlu0 %713
        %v717 = vadd.f32 %v676, %v712
        %v718 = vadd.f32 %v677, %v714
        %vm719 = vcmask 523712
        %v720 = vsel %vm719, %v441, -inf
        %721 = vmax.xlane.f32.xlu0 %v720
        %v722 = vpop.xlane.xlu0 %721
        %v723 = vsel %vm719, %v446, -inf
        %724 = vmax.xlane.f32.xlu0 %v723
        %v725 = vpop.xlane.xlu0 %724
        %v726 = vsub.f32 %v441, %v722
        %v727 = vsub.f32 %v446, %v725
        %v728 = vmul.f32 %v726, 1.442695
        %v729 = vpow.pop %v728
        %v730 = vmul.f32 %v727, 1.442695
        %v731 = vpow.pop %v730
        %734 = vrot.lane.b32.xlu0 %v729, 72
        %v735 = vpop.permute.xlu0 %734
        %736 = vrot.lane.b32.xlu0 %v731, 72
        %v737 = vpop.permute.xlu0 %736
        %v740 = vsel %vm340, %v735, 0.0
        %741 = vadd.xlane.f32.xlu0 %v740
        %v742 = vpop.xlane.xlu0 %741
        %v743 = vsel %vm340, %v737, 0.0
        %744 = vadd.xlane.f32.xlu0 %v743
        %v745 = vpop.xlane.xlu0 %744
        %v746 = vrcp.pop %v742
        %v747 = vmul.f32 %v729, %v746
        %v748 = vrcp.pop %v745
        %v749 = vmul.f32 %v731, %v748
        %752 = vrot.lane.b32.xlu0 %v747, 72
        %v753 = vpop.permute.xlu0 %752
        %754 = vrot.lane.b32.xlu0 %v749, 72
        %v755 = vpop.permute.xlu0 %754
        %v758 = vadd.f32 %v717, %v753
        %v759 = vadd.f32 %v718, %v755
        %v760 = vsel %vm340, %v758, 1.0
        %v761 = vsel %vm340, %v759, 1.0
        %v762 = vld [vmem:[%s2] sm:$0xff]
        %v763 = vld [vmem:[%s2 + $0x8] sm:$0x1]
        %v765 = vsel %vm343, %v760, 0
        %v768 = vsel %vm343, %v761, 0
        %vm770 = vcmask 1040384
        %v772 = vsel %vm770, %v763, 0
        %774 = vmatprep.subr.mxu0 0.0
        %775 = vmatpush1.msra.mxu0 0.0
        %776 = vmatprep.subr.mxu0 0.0
        %777 = vmatpush1.msra.mxu0 0.0
        %778 = vmatprep.subr.mxu0 0.0
        %779 = vmatpush1.msra.mxu0 0.0
        %780 = vmatprep.subr.mxu0 0.0
        %781 = vmatpush1.msra.mxu0 0.0
        %782 = vmatprep.subr.mxu0 0.0
        %783 = vmatpush1.msra.mxu0 0.0
        %784 = vmatprep.subr.mxu0 0.0
        %785 = vmatpush1.msra.mxu0 0.0
        %786 = vmatprep.subr.mxu0 0.0
        %787 = vmatpush1.msra.mxu0 0.0
        %788 = vmatprep.subr.mxu0 0.0
        %789 = vmatpush1.msra.mxu0 0.0
        %790 = vmatprep.subr.mxu0 0.0
        %791 = vmatpush1.msra.mxu0 0.0
        %792 = vmatprep.subr.mxu0 0.0
        %793 = vmatpush1.msra.mxu0 0.0
        %794 = vmatprep.subr.mxu0 0.0
        %795 = vmatpush1.msra.mxu0 0.0
        %796 = vmatprep.subr.mxu0 0.0
        %797 = vmatpush1.msra.mxu0 0.0
        %798 = vmatprep.subr.mxu0 0.0
        %799 = vmatpush1.msra.mxu0 0.0
        %800 = vmatprep.subr.mxu0 0.0
        %801 = vmatpush1.msra.mxu0 0.0
        %802 = vmatprep.subr.mxu0 0.0
        %803 = vmatpush1.msra.mxu0 %v772
        %804 = vmatprep.subr.mxu0 0.0
        %805 = vmatpush1.msra.mxu0 %v762
        %806 = vmatprep.subr.mxu0 0.0
        %807 = vmatpush2.msra.mxu0 0.0
        %808 = vmatprep.subr.mxu0 0.0
        %809 = vmatpush2.msra.mxu0 0.0
        %810 = vmatprep.subr.mxu0 0.0
        %811 = vmatpush2.msra.mxu0 0.0
        %812 = vmatprep.subr.mxu0 0.0
        %813 = vmatpush2.msra.mxu0 0.0
        %814 = vmatprep.subr.mxu0 0.0
        %815 = vmatpush2.msra.mxu0 0.0
        %816 = vmatprep.subr.mxu0 0.0
        %817 = vmatpush2.msra.mxu0 0.0
        %818 = vmatprep.subr.mxu0 0.0
        %819 = vmatpush2.msra.mxu0 0.0
        %820 = vmatprep.subr.mxu0 0.0
        %821 = vmatpush2.msra.mxu0 0.0
        %822 = vmatprep.subr.mxu0 0.0
        %823 = vmatpush2.msra.mxu0 0.0
        %824 = vmatprep.subr.mxu0 0.0
        %825 = vmatpush2.msra.mxu0 0.0
        %826 = vmatprep.subr.mxu0 0.0
        %827 = vmatpush2.msra.mxu0 0.0
        %828 = vmatprep.subr.mxu0 0.0
        %829 = vmatpush2.msra.mxu0 0.0
        %830 = vmatprep.subr.mxu0 0.0
        %831 = vmatpush2.msra.mxu0 0.0
        %832 = vmatprep.subr.mxu0 0.0
        %833 = vmatpush2.msra.mxu0 0.0
        %834 = vmatprep.subr.mxu0 0.0
        %835 = vmatpush2.msra.mxu0 0.0
        %836 = vmatprep.subr.mxu0 0.0
        %837 = vmatpush2.msra.mxu0 0.0
        %838 = vmatprep.mubr.f32.mxu0 0.0
        %839 = vmatmul.mubr.f32.gmra.mxu0 %v765
        %v840 = vpop.f32.mrf.mxu0
        %v841 = vadd.f32 0.0, %v840
        %v842 = vpop.f32.mrf.mxu0
        %843 = vmatprep.mubr.f32.mxu0 0.0
        %844 = vmatmul.mubr.f32.gmra.mxu0 %v768
        %v845 = vpop.f32.mrf.mxu0
        %v846 = vadd.f32 0.0, %v845
        %v847 = vpop.f32.mrf.mxu0
        %848 = vdwg.mxu0
        %850 = vset.pattern.permute.xlu0 0
        %851 = vperm.xlu0 %850, %v841
        %v852 = vpop.permute.xlu0 %851
        %855 = vset.pattern.permute.xlu0 0
        %856 = vperm.xlu0 %855, %v846
        %v857 = vpop.permute.xlu0 %856
        %v859 = vmul.f32 %v852, %v235
        %v860 = vmul.f32 %v857, %v236
        %861 = vset.pattern.permute.xlu0 16
        %862 = vperm.xlu0 %861, %v841
        %v863 = vpop.permute.xlu0 %862
        %865 = vset.pattern.permute.xlu0 16
        %866 = vperm.xlu0 %865, %v846
        %v867 = vpop.permute.xlu0 %866
        %v869 = vadd.f32 %v863, %v859
        %v870 = vadd.f32 %v867, %v860
        %871 = vset.pattern.permute.xlu0 1
        %872 = vperm.xlu0 %871, %v841
        %v873 = vpop.permute.xlu0 %872
        %875 = vset.pattern.permute.xlu0 1
        %876 = vperm.xlu0 %875, %v846
        %v877 = vpop.permute.xlu0 %876
        %v879 = vmul.f32 %v873, %v237
        %v880 = vmul.f32 %v877, %v238
        %v881 = vadd.f32 %v869, %v879
        %v882 = vadd.f32 %v870, %v880
        %883 = vset.pattern.permute.xlu0 2
        %884 = vperm.xlu0 %883, %v841
        %v885 = vpop.permute.xlu0 %884
        %887 = vset.pattern.permute.xlu0 2
        %888 = vperm.xlu0 %887, %v846
        %v889 = vpop.permute.xlu0 %888
        %v891 = vmul.f32 %v885, %v239
        %v892 = vmul.f32 %v889, %v240
        %v893 = vadd.f32 %v881, %v891
        %v894 = vadd.f32 %v882, %v892
        %895 = vset.pattern.permute.xlu0 3
        %896 = vperm.xlu0 %895, %v841
        %v897 = vpop.permute.xlu0 %896
        %899 = vset.pattern.permute.xlu0 3
        %900 = vperm.xlu0 %899, %v846
        %v901 = vpop.permute.xlu0 %900
        %v903 = vmul.f32 %v897, %v241
        %v904 = vmul.f32 %v901, %v242
        %v905 = vadd.f32 %v893, %v903
        %v906 = vadd.f32 %v894, %v904
        %907 = vst [vmem:[%s232] sm:$0xff] %v905
        %908 = vst [vmem:[%s232 + $0x8] sm:$0xff] %v906
        %909 = vset.pattern.permute.xlu0 4
        %910 = vperm.xlu0 %909, %v841
        %v911 = vpop.permute.xlu0 %910
        %913 = vset.pattern.permute.xlu0 4
        %914 = vperm.xlu0 %913, %v846
        %v915 = vpop.permute.xlu0 %914
        %v917 = vmul.f32 %v911, %v235
        %v918 = vmul.f32 %v915, %v236
        %919 = vset.pattern.permute.xlu0 17
        %920 = vperm.xlu0 %919, %v841
        %v921 = vpop.permute.xlu0 %920
        %923 = vset.pattern.permute.xlu0 17
        %924 = vperm.xlu0 %923, %v846
        %v925 = vpop.permute.xlu0 %924
        %v927 = vadd.f32 %v921, %v917
        %v928 = vadd.f32 %v925, %v918
        %929 = vset.pattern.permute.xlu0 5
        %930 = vperm.xlu0 %929, %v841
        %v931 = vpop.permute.xlu0 %930
        %933 = vset.pattern.permute.xlu0 5
        %934 = vperm.xlu0 %933, %v846
        %v935 = vpop.permute.xlu0 %934
        %v937 = vmul.f32 %v931, %v237
        %v938 = vmul.f32 %v935, %v238
        %v939 = vadd.f32 %v927, %v937
        %v940 = vadd.f32 %v928, %v938
        %941 = vset.pattern.permute.xlu0 6
        %942 = vperm.xlu0 %941, %v841
        %v943 = vpop.permute.xlu0 %942
        %945 = vset.pattern.permute.xlu0 6
        %946 = vperm.xlu0 %945, %v846
        %v947 = vpop.permute.xlu0 %946
        %v949 = vmul.f32 %v943, %v239
        %v950 = vmul.f32 %v947, %v240
        %v951 = vadd.f32 %v939, %v949
        %v952 = vadd.f32 %v940, %v950
        %953 = vset.pattern.permute.xlu0 7
        %954 = vperm.xlu0 %953, %v841
        %v955 = vpop.permute.xlu0 %954
        %957 = vset.pattern.permute.xlu0 7
        %958 = vperm.xlu0 %957, %v846
        %v959 = vpop.permute.xlu0 %958
        %v961 = vmul.f32 %v955, %v241
        %v962 = vmul.f32 %v959, %v242
        %v963 = vadd.f32 %v951, %v961
        %v964 = vadd.f32 %v952, %v962
        %s965 = scalar_lea.vmem %s232, 16 [#allocation3]
        %966 = vst [vmem:[%s965] sm:$0xff] %v963
        %967 = vst [vmem:[%s965 + $0x8] sm:$0xff] %v964
        %968 = vset.pattern.permute.xlu0 8
        %969 = vperm.xlu0 %968, %v841
        %v970 = vpop.permute.xlu0 %969
        %972 = vset.pattern.permute.xlu0 8
        %973 = vperm.xlu0 %972, %v846
        %v974 = vpop.permute.xlu0 %973
        %v976 = vmul.f32 %v970, %v235
        %v977 = vmul.f32 %v974, %v236
        %978 = vset.pattern.permute.xlu0 18
        %979 = vperm.xlu0 %978, %v841
        %v980 = vpop.permute.xlu0 %979
        %982 = vset.pattern.permute.xlu0 18
        %983 = vperm.xlu0 %982, %v846
        %v984 = vpop.permute.xlu0 %983
        %v986 = vadd.f32 %v980, %v976
        %v987 = vadd.f32 %v984, %v977
        %988 = vset.pattern.permute.xlu0 9
        %989 = vperm.xlu0 %988, %v841
        %v990 = vpop.permute.xlu0 %989
        %992 = vset.pattern.permute.xlu0 9
        %993 = vperm.xlu0 %992, %v846
        %v994 = vpop.permute.xlu0 %993
        %v996 = vmul.f32 %v990, %v237
        %v997 = vmul.f32 %v994, %v238
        %v998 = vadd.f32 %v986, %v996
        %v999 = vadd.f32 %v987, %v997
        %1000 = vset.pattern.permute.xlu0 10
        %1001 = vperm.xlu0 %1000, %v841
        %v1002 = vpop.permute.xlu0 %1001
        %1004 = vset.pattern.permute.xlu0 10
        %1005 = vperm.xlu0 %1004, %v846
        %v1006 = vpop.permute.xlu0 %1005
        %v1008 = vmul.f32 %v1002, %v239
        %v1009 = vmul.f32 %v1006, %v240
        %v1010 = vadd.f32 %v998, %v1008
        %v1011 = vadd.f32 %v999, %v1009
        %1012 = vset.pattern.permute.xlu0 11
        %1013 = vperm.xlu0 %1012, %v841
        %v1014 = vpop.permute.xlu0 %1013
        %1016 = vset.pattern.permute.xlu0 11
        %1017 = vperm.xlu0 %1016, %v846
        %v1018 = vpop.permute.xlu0 %1017
        %v1020 = vmul.f32 %v1014, %v241
        %v1021 = vmul.f32 %v1018, %v242
        %v1022 = vadd.f32 %v1010, %v1020
        %v1023 = vadd.f32 %v1011, %v1021
        %s1024 = scalar_lea.vmem %s232, 32 [#allocation3]
        %1025 = vst [vmem:[%s1024] sm:$0xff] %v1022
        %1026 = vst [vmem:[%s1024 + $0x8] sm:$0xff] %v1023
        %1027 = vset.pattern.permute.xlu0 12
        %1028 = vperm.xlu0 %1027, %v841
        %v1029 = vpop.permute.xlu0 %1028
        %1031 = vset.pattern.permute.xlu0 12
        %1032 = vperm.xlu0 %1031, %v846
        %v1033 = vpop.permute.xlu0 %1032
        %v1035 = vmul.f32 %v1029, %v235
        %v1036 = vmul.f32 %v1033, %v236
        %1037 = vset.pattern.permute.xlu0 19
        %1038 = vperm.xlu0 %1037, %v841
        %v1039 = vpop.permute.xlu0 %1038
        %1041 = vset.pattern.permute.xlu0 19
        %1042 = vperm.xlu0 %1041, %v846
        %v1043 = vpop.permute.xlu0 %1042
        %v1045 = vadd.f32 %v1039, %v1035
        %v1046 = vadd.f32 %v1043, %v1036
        %1047 = vset.pattern.permute.xlu0 13
        %1048 = vperm.xlu0 %1047, %v841
        %v1049 = vpop.permute.xlu0 %1048
        %1051 = vset.pattern.permute.xlu0 13
        %1052 = vperm.xlu0 %1051, %v846
        %v1053 = vpop.permute.xlu0 %1052
        %v1055 = vmul.f32 %v1049, %v237
        %v1056 = vmul.f32 %v1053, %v238
        %v1057 = vadd.f32 %v1045, %v1055
        %v1058 = vadd.f32 %v1046, %v1056
        %1059 = vset.pattern.permute.xlu0 14
        %1060 = vperm.xlu0 %1059, %v841
        %v1061 = vpop.permute.xlu0 %1060
        %1063 = vset.pattern.permute.xlu0 14
        %1064 = vperm.xlu0 %1063, %v846
        %v1065 = vpop.permute.xlu0 %1064
        %v1067 = vmul.f32 %v1061, %v239
        %v1068 = vmul.f32 %v1065, %v240
        %v1069 = vadd.f32 %v1057, %v1067
        %v1070 = vadd.f32 %v1058, %v1068
        %1071 = vset.pattern.permute.xlu0 15
        %1072 = vperm.xlu0 %1071, %v841
        %v1073 = vpop.permute.xlu0 %1072
        %1075 = vset.pattern.permute.xlu0 15
        %1076 = vperm.xlu0 %1075, %v846
        %v1077 = vpop.permute.xlu0 %1076
        %v1079 = vmul.f32 %v1073, %v241
        %v1080 = vmul.f32 %v1077, %v242
        %v1081 = vadd.f32 %v1069, %v1079
        %v1082 = vadd.f32 %v1070, %v1080
        %s1083 = scalar_lea.vmem %s232, 48 [#allocation3]
        %1084 = vst [vmem:[%s1083] sm:$0xff] %v1081
        %1085 = vst [vmem:[%s1083 + $0x8] sm:$0xff] %v1082
        %s1086 = sand.u32 %s93, 1
        %s1087 = scalar_lea.sflag [#allocation4], %s1086
        %s1088 = sand.u32 %s93, 1
        %s1089 = smul.addr %s1088, 64
        %s1090 = scalar_lea.vmem [#allocation3], %s1089
        // Predicated region
        $region71: #{nonequi_channels_attention.1} parent=65 // pred_check
          %p1091 = pneg %p103
        $region72: #{nonequi_channels_attention.1} parent=65 // pred_check_branch
          %1093 = sbr.rel (%p1091) target = $region74
        $region73: #{nonequi_channels_attention.1} parent=65 // pred_region
          #allocation6 [shape = 'u32[6]{0}', space=smem, size = 0x18, scoped, tag = 'DMA stride descriptor']
          %s1094 = smul.u32 2, %s17
          %s1096 = ssub.s32 1024, 1024
          %1097 = vsyncadd %s1087, %s1096
          %s1098 = smul.addr %s1094, 128
          %s1099 = scalar_lea.hbm %s3, %s1098
          %s1101 = sshll.u32 1, 14
          %s1102 = sxor.u32 4294967295, %s1101
          %s1105 = sshll.u32 7, 18
          %s1106 = sxor.u32 4294967295, %s1105
          %s1107 = sand.u32 0, %s1106
          %s1109 = sor.u32 %s1107, 0
          %s1110 = sshll.u32 %s1090, 4
          %s1111 = int_to_ptr.vmem [resolvable:$true] %s1110
          %1117 = sst [smem:[#allocation6]] 256
          %s1118 = scalar_lea.smem [#allocation6], 1
          %1119 = sst [smem:[%s1118]] 512
          %s1120 = scalar_lea.smem [#allocation6], 2
          %1121 = sst [smem:[%s1120]] 2
          %s1122 = scalar_lea.smem [#allocation6], 3
          %1123 = sst [smem:[%s1122]] 128
          %s1124 = scalar_lea.smem [#allocation6], 4
          %1125 = sst [smem:[%s1124]] 128
          %s1126 = scalar_lea.smem [#allocation6], 5
          %1127 = sst [smem:[%s1126]] 8
          %1129 = dma.general %s1111, 1024, %s1099, %s1087, 131072, [#allocation6], %s1109, 0
        $region74: #{nonequi_channels_attention.1} parent=65 // pred_fallthru
          _
      $region66: #{nonequi_channels_attention.1} parent=5 // pred_fallthru
        _
      %p1130 = scmp.le.s32.totalorder 2, %s12
      // Predicated region
      $region75: #{nonequi_channels_attention.1} parent=5 // pred_check
        %p1131 = pneg %p1130
      $region76: #{nonequi_channels_attention.1} parent=5 // pred_check_branch
        %1133 = sbr.rel (%p1131) target = $region78
      $region77: #{nonequi_channels_attention.1} parent=5 // pred_region
        %s1134 = ssub.s32 %s12, 2
        // Predicated region
        $region79: #{nonequi_channels_attention.1} parent=77 // pred_check
          %p1135 = pneg %p109
        $region80: #{nonequi_channels_attention.1} parent=77 // pred_check_branch
          %1137 = sbr.rel (%p1135) target = $region82
        $region81: #{nonequi_channels_attention.1} parent=77 // pred_region
          %s1138 = sand.u32 %s94, 1
          %s1139 = scalar_lea.sflag [#allocation4], %s1138
          %s1140 = sand.u32 %s94, 1
          %s1141 = smul.addr %s1140, 64
          %s1142 = scalar_lea.vmem [#allocation3], %s1141
          %1143 = dma.done %s1139, 1024
        $region82: #{nonequi_channels_attention.1} parent=77 // pred_fallthru
          _
      $region78: #{nonequi_channels_attention.1} parent=5 // pred_fallthru
        _
    $region6: #{nonequi_channels_attention.1} parent=1 // loop_footer
      %s16 = sadd.s32 1, %s12
    $region7: #{nonequi_channels_attention.1} parent=1 // loop_footer_branch
      %11 = sbr.rel target = $region3
    $region8: #{nonequi_channels_attention.1} parent=1 // loop_exit
      _
    %1144 = vsyncpa [#allocation4], 1
    %s1145 = scalar_lea.sflag [#allocation4], 1
    %1146 = vsyncpa %s1145, 1

</llo_original>
